<compile_context>
chip_gen: v6e
topology: v6e:2x2x1
jax: 0.10.0
libtpu: 0.0.40
codegen_flags: <defaults>
</compile_context>

<pallas_src>
import functools
import math

import numpy as np
import jax
import jax.numpy as jnp
from jax.experimental import pallas as pl
from jax.experimental.pallas import tpu as pltpu

EPS = float(np.finfo(np.float32).eps)
_NEG_LOG_EPS = float(-math.log(EPS))          # -log(eps)    ~= 15.9424
_NEG_LOG_1M_EPS = float(-math.log1p(-EPS))    # -log(1-eps)  ~= 1.19e-7


def _marginal_bernoulli_kernel(x_ref, w_ref, b_ref, kset_ref, logf_ref, rep_ref, sel_ref,
                               kl_ref, *, tn, n_valid):
    i = pl.program_id(0)

    x = x_ref[...]                                   # [tn, D]    f32
    w = w_ref[...]                                   # [D, H]     f32
    b = b_ref[...]                                   # [1, H]     f32
    kset = kset_ref[...]                             # [tn, K*H]  int8 (binary 0/1)
    logf = logf_ref[...]                             # [tn, K]    f32
    rep = rep_ref[...]                               # [K, K*H]   f32 0/1: rep[k, k*H+h] = 1
    sel = sel_ref[...]                               # [K*H, H]   f32 0/1: sel[k*H+h, h] = 1

    # Amortized variational params (linear head) -> logits of q, [tn, H]   (MXU)
    m = jnp.dot(x, w, preferred_element_type=jnp.float32) + b

    # Stable softmax over the K (particle) axis, K on lanes.
    lf_max = jnp.max(logf, axis=-1, keepdims=True)
    f = jnp.exp(logf - lf_max)
    denom = jnp.sum(f, axis=-1, keepdims=True)
    inv = pl.reciprocal(denom, approx=True)          # EUP slot
    inv = inv * (2.0 - denom * inv)                  # one Newton step (VPU) -> ~f32 accuracy
    ps = f * inv                                     # [tn, K]

    # marginal[n, h] = sum_k Kset[n, k, h] * Ps[n, k], kept on the flattened (k,h) lane axis.
    ps_rep = jnp.dot(ps, rep, preferred_element_type=jnp.float32)      # [tn, K*H]  (MXU)
    prod = kset.astype(jnp.float32) * ps_rep                            # [tn, K*H]  (VPU)
    marginal = jnp.dot(prod, sel, preferred_element_type=jnp.float32)   # [tn, H]    (MXU)
    p = jnp.clip(marginal, 0.01, 0.99)

    # stable_cross_entropy(p, logit_q=m) with q = clip(sigmoid(m), EPS, 1-EPS):
    #   -log q     = clip(softplus(-m), -log(1-EPS), -log EPS)
    #   -log (1-q) = clip(softplus( m), -log(1-EPS), -log EPS)
    sp_pos = jnp.maximum(m, 0.0) + jnp.log1p(jnp.exp(-jnp.abs(m)))      # softplus(m)
    sp_neg = sp_pos - m                                                  # softplus(-m)
    neg_log_q = jnp.clip(sp_neg, _NEG_LOG_1M_EPS, _NEG_LOG_EPS)
    neg_log_1mq = jnp.clip(sp_pos, _NEG_LOG_1M_EPS, _NEG_LOG_EPS)
    cross_h = p * neg_log_q + (1.0 - p) * neg_log_1mq                    # [tn, H]

    # Entropy of the clipped marginal.
    h_p = -(p * jnp.log(p) + (1.0 - p) * jnp.log(1.0 - p))               # [tn, H]

    # Per-tile partial sum of the KL rows, masking any padded tail rows.
    row = i * tn + jax.lax.broadcasted_iota(jnp.int32, (tn, 1), 0)
    mask = (row < n_valid).astype(jnp.float32)                           # [tn, 1]
    row_kl = jnp.sum((cross_h - h_p) * mask, axis=-1, keepdims=True)     # [tn, 1] (lane reduce)
    tile_sum = jnp.sum(row_kl, axis=0, keepdims=True)                    # [1, 1]  (sublane reduce)
    kl_ref[...] = jnp.broadcast_to(tile_sum.reshape(1, 1, 1), kl_ref.shape)  # lane-dense (1,8,128)


def _round_up(x, m):
    return ((x + m - 1) // m) * m


def _vmem_limit_bytes():
    """Per-generation VMEM limit: ~60% of physical capacity, capped at 48 MiB.
    v5e/v6e (128 MiB) -> 48 MiB; v7x (64 MiB) -> ~38 MiB."""
    cap = 128 * 1024 * 1024
    try:
        cap = int(pltpu.get_tpu_info().vmem_capacity_bytes)
    except Exception:
        pass
    return min(int(cap * 0.6), 48 * 1024 * 1024)


def _choose_tn(N, D, K, H, vmem_limit, max_tn=4096):
    """Largest row tile (multiple of 32, for the int8 Kset block) whose padding-aware VMEM
    footprint fits ~75% of the limit, keeping >= 4 grid steps when the batch allows it
    (v7x: two TensorCores x >= 2 pipelined steps each)."""
    KH_pad = _round_up(K * H, 128)
    D_pad = _round_up(D, 128)
    K_pad = _round_up(K, 128)
    H_pad = _round_up(H, 128)
    # double-buffered input blocks + f32 temporaries, per row (minor dims padded to 128 lanes)
    per_row = (2 * (KH_pad * 1 + D_pad * 4 + K_pad * 4)
               + 4 * (3 * KH_pad + 8 * H_pad + 2 * K_pad))
    fixed = 2 * 4 * (_round_up(D, 8) * H_pad + 8 * H_pad
                     + _round_up(K, 8) * KH_pad + _round_up(K * H, 8) * H_pad)
    budget = max(int(vmem_limit * 0.75) - fixed, 32 * per_row)
    tn = min(max_tn, (budget // per_row) // 32 * 32)
    tn = max(tn, 32)
    if N >= 4 * 32:
        tn = min(tn, _round_up(pl.cdiv(N, 4), 32))    # >= 4 grid steps
    else:
        tn = min(tn, _round_up(max(N, 1), 32))        # tiny batch: one (or few) blocks
    return tn


def marginal_bernoulli_objective(X, Kset, log_f, W, b, *, tn=None):
    """Scalar objective mean_n KL(p_n || q_n), matching MarginalBernoulli.forward()['objective'].
    TODO(synk): variationalparams is an arbitrary torch module; modeled here as the common
    amortized linear head Linear(D, H) (X @ W + b)."""
    N, D = X.shape
    _, K, H = Kset.shape
    KH = K * H

    X = X.astype(jnp.float32)
    W = W.astype(jnp.float32)
    b2 = jnp.asarray(b, jnp.float32).reshape(1, H)
    log_f2 = log_f.astype(jnp.float32).reshape(N, K)
    # TODO(synk): Kset is a binary {0,1} posterior set per the module spec, so int8 transport is
    # lossless (quarters HBM traffic vs f32); use f32 here if Kset can ever be soft-valued.
    kset_i8 = Kset.reshape(N, KH).astype(jnp.int8)

    # Tiny constant 0/1 matrices for the MXU-based (k, h) bookkeeping (replicated blocks are not
    # re-DMA'd across grid steps):
    #   rep[k, k*H + h] = 1  ->  Ps @ rep replicates Ps along the flattened (k,h) lane axis
    #   sel[k*H + h, h] = 1  ->  prod @ sel sums over k for every h
    k_of_j = np.arange(KH) // H
    h_of_j = np.arange(KH) % H
    rep = jnp.asarray((k_of_j[None, :] == np.arange(K)[:, None]).astype(np.float32))   # [K, KH]
    sel = jnp.asarray((h_of_j[:, None] == np.arange(H)[None, :]).astype(np.float32))   # [KH, H]

    vmem_limit = _vmem_limit_bytes()
    if tn is None:
        tn = _choose_tn(N, D, K, H, vmem_limit)
    n_pad = int(pl.cdiv(N, tn)) * tn
    if n_pad != N:                                   # padded tail rows are masked in-kernel
        pad = n_pad - N
        X = jnp.pad(X, ((0, pad), (0, 0)))
        kset_i8 = jnp.pad(kset_i8, ((0, pad), (0, 0)))
        log_f2 = jnp.pad(log_f2, ((0, pad), (0, 0)))
    grid = n_pad // tn

    kernel = functools.partial(_marginal_bernoulli_kernel, tn=tn, n_valid=N)
    partials = pl.pallas_call(
        kernel,
        out_shape=jax.ShapeDtypeStruct((grid, 8, 128), jnp.float32),
        grid_spec=pltpu.PrefetchScalarGridSpec(
            num_scalar_prefetch=0,
            grid=(grid,),
            in_specs=[
                pl.BlockSpec((tn, D), lambda i: (i, 0)),      # X
                pl.BlockSpec((D, H), lambda i: (0, 0)),       # W    (replicated)
                pl.BlockSpec((1, H), lambda i: (0, 0)),       # b    (replicated)
                pl.BlockSpec((tn, KH), lambda i: (i, 0)),     # Kset (int8, lane-dense K*H)
                pl.BlockSpec((tn, K), lambda i: (i, 0)),      # log_f (2-D)
                pl.BlockSpec((K, KH), lambda i: (0, 0)),      # rep  (replicated)
                pl.BlockSpec((KH, H), lambda i: (0, 0)),      # sel  (replicated)
            ],
            out_specs=pl.BlockSpec((1, 8, 128), lambda i: (i, 0, 0)),
        ),
        compiler_params=pltpu.CompilerParams(
            dimension_semantics=("parallel",),   # independent per-tile partials -> megacore-shardable
            vmem_limit_bytes=vmem_limit,
        ),
    )(X, W, b2, kset_i8, log_f2, rep, sel)

    # Tiny glue: mean over N of the per-tile partial sums (matches KL_pq.mean()).
    return jnp.sum(partials[:, 0, 0]) / N


def _reference_objective(X, Kset, log_f, W, b):
    """Pure-JAX reference mirroring the PyTorch module (clipped-sigmoid form)."""
    m_params = X @ W + b
    lf_max = jnp.max(log_f, axis=-1, keepdims=True)
    f = jnp.exp(log_f - lf_max)
    ps = f / jnp.sum(f, axis=-1, keepdims=True)
    p = jnp.clip(jnp.sum(Kset * ps[..., None], axis=-2), 0.01, 0.99)
    q = jnp.clip(jax.nn.sigmoid(m_params), EPS, 1.0 - EPS)
    cross_h = -(p * jnp.log(q) + (1 - p) * jnp.log(1 - q)).sum(-1)
    h_p = -(p * jnp.log(p) + (1 - p) * jnp.log(1 - p)).sum(-1)
    return jnp.mean(cross_h - h_p)


if __name__ == "__main__":
    # Small shapes consistent with the forward signature:
    #   X [N, D], Kset [N, K, H] (binary), log_f [N, K]
    N, D, K, H = 256, 16, 8, 32

    key = jax.random.PRNGKey(0)
    kx, kk, kf, kw, kb = jax.random.split(key, 5)

    X = jax.random.normal(kx, (N, D), dtype=jnp.float32)
    Kset = jax.random.bernoulli(kk, 0.5, (N, K, H)).astype(jnp.float32)
    log_f = jax.random.normal(kf, (N, K), dtype=jnp.float32)

    # Deterministic synthetic parameters for the variationalparams linear head.
    W = jax.random.normal(kw, (D, H), dtype=jnp.float32) * np.float32(1.0 / np.sqrt(D))
    b = jax.random.normal(kb, (1, H), dtype=jnp.float32) * 0.1

    obj = marginal_bernoulli_objective(X, Kset, log_f, W, b)
    obj = jax.block_until_ready(obj)

    ref = _reference_objective(X, Kset, log_f, W, b)
    # Tolerance sized for MXU f32 pass-decomposition differences between the Pallas matmuls and
    # the XLA reference; structural errors would be orders of magnitude larger.
    assert jnp.allclose(obj, ref, rtol=5e-3, atol=5e-3), (obj, ref)

    print("KERNEL_OK")
</pallas_src>

<mosaic_0001>
module attributes {stable_mosaic.version = 11 : i64} {
  func.func @_marginal_bernoulli_kernel(%arg0: i32, %arg1: memref<64x16xf32, #tpu.memory_space<vmem>>, %arg2: memref<16x32xf32, #tpu.memory_space<vmem>>, %arg3: memref<1x32xf32, #tpu.memory_space<vmem>>, %arg4: memref<64x256xi8, #tpu.memory_space<vmem>>, %arg5: memref<64x8xf32, #tpu.memory_space<vmem>>, %arg6: memref<8x256xf32, #tpu.memory_space<vmem>>, %arg7: memref<256x32xf32, #tpu.memory_space<vmem>>, %arg8: memref<1x8x128xf32, #tpu.memory_space<vmem>>) attributes {dimension_semantics = [#tpu.dimension_semantics<parallel>], iteration_bounds = array<i64: 4>, scalar_prefetch = 0 : i64, scratch_operands = 0 : i64, tpu.core_type = #tpu.core_type<tc>, window_params = [{transform_indices = @transform_0, window_bounds = array<i64: 64, 16>}, {pipeline_mode = #tpu.pipeline_mode<synchronous>, transform_indices = @transform_1, window_bounds = array<i64: 16, 32>}, {pipeline_mode = #tpu.pipeline_mode<synchronous>, transform_indices = @transform_2, window_bounds = array<i64: 1, 32>}, {transform_indices = @transform_3, window_bounds = array<i64: 64, 256>}, {transform_indices = @transform_4, window_bounds = array<i64: 64, 8>}, {pipeline_mode = #tpu.pipeline_mode<synchronous>, transform_indices = @transform_5, window_bounds = array<i64: 8, 256>}, {pipeline_mode = #tpu.pipeline_mode<synchronous>, transform_indices = @transform_6, window_bounds = array<i64: 256, 32>}, {transform_indices = @transform_7, window_bounds = array<i64: 1, 8, 128>}]} {
    %c0 = arith.constant 0 : index
    %c0_0 = arith.constant 0 : index
    %0 = vector.load %arg1[%c0, %c0_0] : memref<64x16xf32, #tpu.memory_space<vmem>>, vector<64x16xf32>
    %c0_1 = arith.constant 0 : index
    %c0_2 = arith.constant 0 : index
    %1 = vector.load %arg2[%c0_1, %c0_2] : memref<16x32xf32, #tpu.memory_space<vmem>>, vector<16x32xf32>
    %c0_3 = arith.constant 0 : index
    %c0_4 = arith.constant 0 : index
    %2 = vector.load %arg3[%c0_3, %c0_4] : memref<1x32xf32, #tpu.memory_space<vmem>>, vector<1x32xf32>
    %c0_5 = arith.constant 0 : index
    %c0_6 = arith.constant 0 : index
    %3 = vector.load %arg4[%c0_5, %c0_6] : memref<64x256xi8, #tpu.memory_space<vmem>>, vector<64x256xi8>
    %c0_7 = arith.constant 0 : index
    %c0_8 = arith.constant 0 : index
    %4 = vector.load %arg5[%c0_7, %c0_8] : memref<64x8xf32, #tpu.memory_space<vmem>>, vector<64x8xf32>
    %c0_9 = arith.constant 0 : index
    %c0_10 = arith.constant 0 : index
    %5 = vector.load %arg6[%c0_9, %c0_10] : memref<8x256xf32, #tpu.memory_space<vmem>>, vector<8x256xf32>
    %c0_11 = arith.constant 0 : index
    %c0_12 = arith.constant 0 : index
    %6 = vector.load %arg7[%c0_11, %c0_12] : memref<256x32xf32, #tpu.memory_space<vmem>>, vector<256x32xf32>
    %cst = arith.constant dense<0.000000e+00> : vector<64x32xf32>
    %7 = tpu.matmul %0, %1, %cst {dimension_numbers = #tpu.dot_dimension_numbers<[1], [0], [0], [1], [0, 0, 1, 1], [], []>} : vector<64x16xf32>, vector<16x32xf32>, vector<64x32xf32> -> vector<64x32xf32>
    %8 = vector.broadcast %2 : vector<1x32xf32> to vector<64x32xf32>
    %9 = arith.addf %7, %8 : vector<64x32xf32>
    %cst_13 = arith.constant dense<0xFF800000> : vector<64xf32>
    %10 = vector.multi_reduction <maximumf>, %4, %cst_13 [1] : vector<64x8xf32> to vector<64xf32>
    %11 = vector.shape_cast %10 : vector<64xf32> to vector<64x1xf32>
    %12 = vector.broadcast %11 : vector<64x1xf32> to vector<64x8xf32>
    %13 = arith.subf %4, %12 : vector<64x8xf32>
    %14 = math.exp %13 : vector<64x8xf32>
    %cst_14 = arith.constant dense<0.000000e+00> : vector<64xf32>
    %15 = vector.multi_reduction <add>, %14, %cst_14 [1] : vector<64x8xf32> to vector<64xf32>
    %16 = vector.shape_cast %15 : vector<64xf32> to vector<64x1xf32>
    %17 = tpu.reciprocal %16 {approx = true} : vector<64x1xf32> -> vector<64x1xf32>
    %18 = arith.mulf %16, %17 : vector<64x1xf32>
    %cst_15 = arith.constant 2.000000e+00 : f32
    %19 = vector.broadcast %cst_15 : f32 to vector<64x1xf32>
    %20 = arith.subf %19, %18 : vector<64x1xf32>
    %21 = arith.mulf %17, %20 : vector<64x1xf32>
    %22 = vector.broadcast %21 : vector<64x1xf32> to vector<64x8xf32>
    %23 = arith.mulf %14, %22 : vector<64x8xf32>
    %cst_16 = arith.constant dense<0.000000e+00> : vector<64x256xf32>
    %24 = tpu.matmul %23, %5, %cst_16 {dimension_numbers = #tpu.dot_dimension_numbers<[1], [0], [0], [1], [0, 0, 1, 1], [], []>} : vector<64x8xf32>, vector<8x256xf32>, vector<64x256xf32> -> vector<64x256xf32>
    %25 = arith.sitofp %3 : vector<64x256xi8> to vector<64x256xf32>
    %26 = arith.mulf %25, %24 : vector<64x256xf32>
    %cst_17 = arith.constant dense<0.000000e+00> : vector<64x32xf32>
    %27 = tpu.matmul %26, %6, %cst_17 {dimension_numbers = #tpu.dot_dimension_numbers<[1], [0], [0], [1], [0, 0, 1, 1], [], []>} : vector<64x256xf32>, vector<256x32xf32>, vector<64x32xf32> -> vector<64x32xf32>
    %cst_18 = arith.constant 0.00999999977 : f32
    %cst_19 = arith.constant 9.900000e-01 : f32
    %28 = vector.broadcast %cst_18 : f32 to vector<64x32xf32>
    %29 = arith.maximumf %28, %27 : vector<64x32xf32>
    %30 = vector.broadcast %cst_19 : f32 to vector<64x32xf32>
    %31 = arith.minimumf %30, %29 : vector<64x32xf32>
    %cst_20 = arith.constant 0.000000e+00 : f32
    %32 = vector.broadcast %cst_20 : f32 to vector<64x32xf32>
    %33 = arith.maximumf %9, %32 : vector<64x32xf32>
    %34 = math.absf %9 : vector<64x32xf32>
    %cst_21 = arith.constant 0.000000e+00 : f32
    %35 = vector.broadcast %cst_21 : f32 to vector<64x32xf32>
    %36 = arith.subf %35, %34 : vector<64x32xf32>
    %37 = math.exp %36 : vector<64x32xf32>
    %38 = math.log1p %37 : vector<64x32xf32>
    %39 = arith.addf %33, %38 : vector<64x32xf32>
    %40 = arith.subf %39, %9 : vector<64x32xf32>
    %cst_22 = arith.constant 1.19209304E-7 : f32
    %cst_23 = arith.constant 15.9423847 : f32
    %41 = vector.broadcast %cst_22 : f32 to vector<64x32xf32>
    %42 = arith.maximumf %41, %40 : vector<64x32xf32>
    %43 = vector.broadcast %cst_23 : f32 to vector<64x32xf32>
    %44 = arith.minimumf %43, %42 : vector<64x32xf32>
    %cst_24 = arith.constant 1.19209304E-7 : f32
    %cst_25 = arith.constant 15.9423847 : f32
    %45 = vector.broadcast %cst_24 : f32 to vector<64x32xf32>
    %46 = arith.maximumf %45, %39 : vector<64x32xf32>
    %47 = vector.broadcast %cst_25 : f32 to vector<64x32xf32>
    %48 = arith.minimumf %47, %46 : vector<64x32xf32>
    %49 = arith.mulf %31, %44 : vector<64x32xf32>
    %cst_26 = arith.constant 1.000000e+00 : f32
    %50 = vector.broadcast %cst_26 : f32 to vector<64x32xf32>
    %51 = arith.subf %50, %31 : vector<64x32xf32>
    %52 = arith.mulf %51, %48 : vector<64x32xf32>
    %53 = arith.addf %49, %52 : vector<64x32xf32>
    %54 = math.log %31 : vector<64x32xf32>
    %55 = arith.mulf %31, %54 : vector<64x32xf32>
    %cst_27 = arith.constant 1.000000e+00 : f32
    %56 = vector.broadcast %cst_27 : f32 to vector<64x32xf32>
    %57 = arith.subf %56, %31 : vector<64x32xf32>
    %cst_28 = arith.constant 1.000000e+00 : f32
    %58 = vector.broadcast %cst_28 : f32 to vector<64x32xf32>
    %59 = arith.subf %58, %31 : vector<64x32xf32>
    %60 = math.log %59 : vector<64x32xf32>
    %61 = arith.mulf %57, %60 : vector<64x32xf32>
    %62 = arith.addf %55, %61 : vector<64x32xf32>
    %cst_29 = arith.constant 0.000000e+00 : f32
    %63 = vector.broadcast %cst_29 : f32 to vector<64x32xf32>
    %64 = arith.subf %63, %62 : vector<64x32xf32>
    %c64_i32 = arith.constant 64 : i32
    %65 = arith.muli %arg0, %c64_i32 : i32
    %66 = tpu.iota {dimensions = array<i32: 0>} : vector<64x1xi32>
    %67 = vector.broadcast %65 : i32 to vector<64x1xi32>
    %68 = arith.addi %67, %66 : vector<64x1xi32>
    %c256_i32 = arith.constant 256 : i32
    %69 = vector.broadcast %c256_i32 : i32 to vector<64x1xi32>
    %70 = arith.cmpi slt, %68, %69 : vector<64x1xi32>
    %71 = arith.extui %70 : vector<64x1xi1> to vector<64x1xi32>
    %72 = arith.sitofp %71 : vector<64x1xi32> to vector<64x1xf32>
    %73 = arith.subf %53, %64 : vector<64x32xf32>
    %74 = vector.broadcast %72 : vector<64x1xf32> to vector<64x32xf32>
    %75 = arith.mulf %73, %74 : vector<64x32xf32>
    %cst_30 = arith.constant dense<0.000000e+00> : vector<64xf32>
    %76 = vector.multi_reduction <add>, %75, %cst_30 [1] : vector<64x32xf32> to vector<64xf32>
    %77 = vector.shape_cast %76 : vector<64xf32> to vector<64x1xf32>
    %cst_31 = arith.constant dense<0.000000e+00> : vector<1xf32>
    %78 = vector.multi_reduction <add>, %77, %cst_31 [0] : vector<64x1xf32> to vector<1xf32>
    %79 = vector.shape_cast %78 : vector<1xf32> to vector<1x1xf32>
    %80 = vector.shape_cast %79 : vector<1x1xf32> to vector<1x1x1xf32>
    %81 = vector.shape_cast %80 : vector<1x1x1xf32> to vector<1x1x1xf32>
    %82 = vector.broadcast %81 : vector<1x1x1xf32> to vector<1x8x128xf32>
    %c0_32 = arith.constant 0 : index
    %c0_33 = arith.constant 0 : index
    %c0_34 = arith.constant 0 : index
    %83 = vector.load %arg8[%c0_32, %c0_33, %c0_34] : memref<1x8x128xf32, #tpu.memory_space<vmem>>, vector<1x8x128xf32>
    tpu.vector_store %arg8[%c0_32, %c0_33, %c0_34], %82 {strides = array<i32>} : memref<1x8x128xf32, #tpu.memory_space<vmem>>, vector<1x8x128xf32>,
    return
  }
  func.func @transform_0(%arg0: i32) -> (i32, i32) {
    %c0_i32 = arith.constant 0 : i32
    %c0_i32_0 = arith.constant 0 : i32
    return %arg0, %c0_i32 : i32, i32
  }
  func.func @transform_1(%arg0: i32) -> (i32, i32) {
    %c0_i32 = arith.constant 0 : i32
    %c0_i32_0 = arith.constant 0 : i32
    %c0_i32_1 = arith.constant 0 : i32
    return %c0_i32, %c0_i32_0 : i32, i32
  }
  func.func @transform_2(%arg0: i32) -> (i32, i32) {
    %c0_i32 = arith.constant 0 : i32
    %c0_i32_0 = arith.constant 0 : i32
    %c0_i32_1 = arith.constant 0 : i32
    return %c0_i32, %c0_i32_0 : i32, i32
  }
  func.func @transform_3(%arg0: i32) -> (i32, i32) {
    %c0_i32 = arith.constant 0 : i32
    %c0_i32_0 = arith.constant 0 : i32
    return %arg0, %c0_i32 : i32, i32
  }
  func.func @transform_4(%arg0: i32) -> (i32, i32) {
    %c0_i32 = arith.constant 0 : i32
    %c0_i32_0 = arith.constant 0 : i32
    return %arg0, %c0_i32 : i32, i32
  }
  func.func @transform_5(%arg0: i32) -> (i32, i32) {
    %c0_i32 = arith.constant 0 : i32
    %c0_i32_0 = arith.constant 0 : i32
    %c0_i32_1 = arith.constant 0 : i32
    return %c0_i32, %c0_i32_0 : i32, i32
  }
  func.func @transform_6(%arg0: i32) -> (i32, i32) {
    %c0_i32 = arith.constant 0 : i32
    %c0_i32_0 = arith.constant 0 : i32
    %c0_i32_1 = arith.constant 0 : i32
    return %c0_i32, %c0_i32_0 : i32, i32
  }
  func.func @transform_7(%arg0: i32) -> (i32, i32, i32) {
    %c0_i32 = arith.constant 0 : i32
    %c0_i32_0 = arith.constant 0 : i32
    %c0_i32_1 = arith.constant 0 : i32
    return %arg0, %c0_i32, %c0_i32_0 : i32, i32, i32
  }
}

</mosaic_0001>

<llo_original>
// kernel: tpu_custom_call.1
$region0: #{tpu_custom_call.1}
  #allocation0 [shape = 'u32[]', space=smem, size = 0x4, offset = 0x4, fixed_abs, tag = 'smem constant byte address 0x4 - core index']
  #allocation1 [shape = 'u32[144,128]{1,0:T(1,128)}', space=vmem, size = 0x12000, scoped, tag = 'internal scratch']
  %s0 = inlined_call_operand.vmem [shape: f32[256,16], index: 0, kind: input, shape index: {}]
  %s1 = inlined_call_operand.vmem [shape: f32[16,32], index: 1, kind: input, shape index: {}]
  %s2 = inlined_call_operand.vmem [shape: f32[1,32], index: 2, kind: input, shape index: {}]
  %s3 = inlined_call_operand.vmem [shape: s8[256,256], index: 3, kind: input, shape index: {}]
  %s4 = inlined_call_operand.vmem [shape: f32[256,8], index: 4, kind: input, shape index: {}]
  %s5 = inlined_call_operand.vmem [shape: f32[8,256], index: 5, kind: input, shape index: {}]
  %s6 = inlined_call_operand.vmem [shape: f32[256,32], index: 6, kind: input, shape index: {}]
  %s7 = inlined_call_operand.hbm [shape: f32[4,8,128], index: 7, kind: output, shape index: {}]
  %s8 = sld [smem:[#allocation0]]
  $region61: #{tpu_custom_call.1} parent=0
    _
  %s10 = ssub.s32 1, %s8
  %s11 = scalar_select 0, %s10, %s8
  $region1: #{tpu_custom_call.1} parent=0
    #allocation2 [shape = 'u8[8192]{0}', space=vmem, size = 0x2000, scoped, tag = 'output window, operand 0']
    #allocation3 [shape = 's32[2]{0}', space=sflag, size = 0x8, scoped, tag = 'scoped memory for tpu_custom_call.1']
    %12 = vsyncpa [#allocation3], 0
    %s13 = scalar_lea.sflag [#allocation3], 1
    %14 = vsyncpa %s13, 0
    loop: start=0, step=1, limit=6
    $region2: #{tpu_custom_call.1} parent=1 // loop_pre_header
      _
    $region3: #{tpu_custom_call.1} parent=1 // loop_header
      %s16 = sphi 0, %s20
      %p17 = scmp.ge.s32.totalorder %s16, 6
      %s26 = sphi 0, %s28
      %s29 = sphi 0, %s26
      %s30 = sphi 0, %s29
      %s46 = sphi 0, %s30
      %s50 = sphi 0, %s50
      %s52 = sphi 0, %s50
      %s53 = sphi 0, %s52
      %s67 = sphi 0, %s53
      %s71 = sphi 0, %s71
      %s73 = sphi 0, %s71
      %s74 = sphi 0, %s73
      %s88 = sphi 0, %s74
      %s94 = sphi 0, %s96
      %s97 = sphi 0, %s94
      %s98 = sphi 0, %s97
      %s114 = sphi 0, %s98
      %s120 = sphi 0, %s122
      %s123 = sphi 0, %s120
      %s124 = sphi 0, %s123
      %s140 = sphi 0, %s124
      %s144 = sphi 0, %s144
      %s146 = sphi 0, %s144
      %s147 = sphi 0, %s146
      %s161 = sphi 0, %s147
      %s165 = sphi 0, %s165
      %s167 = sphi 0, %s165
      %s168 = sphi 0, %s167
      %s182 = sphi 0, %s168
      %s188 = sphi 0, %s190
      %s191 = sphi 0, %s188
      %s192 = sphi 0, %s191
      %s208 = sphi 0, %s192
    $region4: #{tpu_custom_call.1} parent=1 // loop_header_branch
      %19 = sbr.rel (%p17) target = $region8
    $region5: #{tpu_custom_call.1} parent=1 // loop_body
      %s21 = ssub.s32 %s16, 1
      %s22 = ssub.s32 %s16, 2
      %s23 = sadd.s32 %s16, 1
      %s24 = ssub.s32 %s16, %s23
      %p25 = scmp.eq.s32.totalorder %s24, 0
      %s27 = sadd.s32 %s26, 1
      %s28 = scalar_select %p25, %s26, %s27
      %p31 = pneg %p25
      %p32 = scmp.eq.s32.totalorder %s16, 3
      %p33 = por %p31, %p32
      %p34 = scmp.ne.s32.totalorder %s26, %s29
      %p35 = scmp.eq.s32.totalorder %s16, 0
      %p36 = por %p34, %p35
      %p37 = scmp.ne.s32.totalorder %s26, %s29
      %p38 = scmp.eq.s32.totalorder %s21, 3
      %p39 = por %p37, %p38
      %p40 = scmp.ne.s32.totalorder %s29, %s30
      %p41 = scmp.eq.s32.totalorder %s21, 0
      %p42 = por %p40, %p41
      %p43 = scmp.ne.s32.totalorder %s29, %s30
      %p44 = scmp.eq.s32.totalorder %s22, 3
      %p45 = por %p43, %p44
      %p47 = scmp.ne.s32.totalorder %s30, %s46
      %p48 = scmp.eq.s32.totalorder %s22, 0
      %p49 = por %p47, %p48
      %s51 = sadd.s32 %s50, 1
      %p54 = scmp.eq.s32.totalorder %s16, 3
      %p55 = scmp.ne.s32.totalorder %s50, %s52
      %p56 = scmp.eq.s32.totalorder %s16, 0
      %p57 = por %p55, %p56
      %p58 = scmp.ne.s32.totalorder %s50, %s52
      %p59 = scmp.eq.s32.totalorder %s21, 3
      %p60 = por %p58, %p59
      %p61 = scmp.ne.s32.totalorder %s52, %s53
      %p62 = scmp.eq.s32.totalorder %s21, 0
      %p63 = por %p61, %p62
      %p64 = scmp.ne.s32.totalorder %s52, %s53
      %p65 = scmp.eq.s32.totalorder %s22, 3
      %p66 = por %p64, %p65
      %p68 = scmp.ne.s32.totalorder %s53, %s67
      %p69 = scmp.eq.s32.totalorder %s22, 0
      %p70 = por %p68, %p69
      %s72 = sadd.s32 %s71, 1
      %p75 = scmp.eq.s32.totalorder %s16, 3
      %p76 = scmp.ne.s32.totalorder %s71, %s73
      %p77 = scmp.eq.s32.totalorder %s16, 0
      %p78 = por %p76, %p77
      %p79 = scmp.ne.s32.totalorder %s71, %s73
      %p80 = scmp.eq.s32.totalorder %s21, 3
      %p81 = por %p79, %p80
      %p82 = scmp.ne.s32.totalorder %s73, %s74
      %p83 = scmp.eq.s32.totalorder %s21, 0
      %p84 = por %p82, %p83
      %p85 = scmp.ne.s32.totalorder %s73, %s74
      %p86 = scmp.eq.s32.totalorder %s22, 3
      %p87 = por %p85, %p86
      %p89 = scmp.ne.s32.totalorder %s74, %s88
      %p90 = scmp.eq.s32.totalorder %s22, 0
      %p91 = por %p89, %p90
      %s92 = ssub.s32 %s16, %s23
      %p93 = scmp.eq.s32.totalorder %s92, 0
      %s95 = sadd.s32 %s94, 1
      %s96 = scalar_select %p93, %s94, %s95
      %p99 = pneg %p93
      %p100 = scmp.eq.s32.totalorder %s16, 3
      %p101 = por %p99, %p100
      %p102 = scmp.ne.s32.totalorder %s94, %s97
      %p103 = scmp.eq.s32.totalorder %s16, 0
      %p104 = por %p102, %p103
      %p105 = scmp.ne.s32.totalorder %s94, %s97
      %p106 = scmp.eq.s32.totalorder %s21, 3
      %p107 = por %p105, %p106
      %p108 = scmp.ne.s32.totalorder %s97, %s98
      %p109 = scmp.eq.s32.totalorder %s21, 0
      %p110 = por %p108, %p109
      %p111 = scmp.ne.s32.totalorder %s97, %s98
      %p112 = scmp.eq.s32.totalorder %s22, 3
      %p113 = por %p111, %p112
      %p115 = scmp.ne.s32.totalorder %s98, %s114
      %p116 = scmp.eq.s32.totalorder %s22, 0
      %p117 = por %p115, %p116
      %s118 = ssub.s32 %s16, %s23
      %p119 = scmp.eq.s32.totalorder %s118, 0
      %s121 = sadd.s32 %s120, 1
      %s122 = scalar_select %p119, %s120, %s121
      %p125 = pneg %p119
      %p126 = scmp.eq.s32.totalorder %s16, 3
      %p127 = por %p125, %p126
      %p128 = scmp.ne.s32.totalorder %s120, %s123
      %p129 = scmp.eq.s32.totalorder %s16, 0
      %p130 = por %p128, %p129
      %p131 = scmp.ne.s32.totalorder %s120, %s123
      %p132 = scmp.eq.s32.totalorder %s21, 3
      %p133 = por %p131, %p132
      %p134 = scmp.ne.s32.totalorder %s123, %s124
      %p135 = scmp.eq.s32.totalorder %s21, 0
      %p136 = por %p134, %p135
      %p137 = scmp.ne.s32.totalorder %s123, %s124
      %p138 = scmp.eq.s32.totalorder %s22, 3
      %p139 = por %p137, %p138
      %p141 = scmp.ne.s32.totalorder %s124, %s140
      %p142 = scmp.eq.s32.totalorder %s22, 0
      %p143 = por %p141, %p142
      %s145 = sadd.s32 %s144, 1
      %p148 = scmp.eq.s32.totalorder %s16, 3
      %p149 = scmp.ne.s32.totalorder %s144, %s146
      %p150 = scmp.eq.s32.totalorder %s16, 0
      %p151 = por %p149, %p150
      %p152 = scmp.ne.s32.totalorder %s144, %s146
      %p153 = scmp.eq.s32.totalorder %s21, 3
      %p154 = por %p152, %p153
      %p155 = scmp.ne.s32.totalorder %s146, %s147
      %p156 = scmp.eq.s32.totalorder %s21, 0
      %p157 = por %p155, %p156
      %p158 = scmp.ne.s32.totalorder %s146, %s147
      %p159 = scmp.eq.s32.totalorder %s22, 3
      %p160 = por %p158, %p159
      %p162 = scmp.ne.s32.totalorder %s147, %s161
      %p163 = scmp.eq.s32.totalorder %s22, 0
      %p164 = por %p162, %p163
      %s166 = sadd.s32 %s165, 1
      %p169 = scmp.eq.s32.totalorder %s16, 3
      %p170 = scmp.ne.s32.totalorder %s165, %s167
      %p171 = scmp.eq.s32.totalorder %s16, 0
      %p172 = por %p170, %p171
      %p173 = scmp.ne.s32.totalorder %s165, %s167
      %p174 = scmp.eq.s32.totalorder %s21, 3
      %p175 = por %p173, %p174
      %p176 = scmp.ne.s32.totalorder %s167, %s168
      %p177 = scmp.eq.s32.totalorder %s21, 0
      %p178 = por %p176, %p177
      %p179 = scmp.ne.s32.totalorder %s167, %s168
      %p180 = scmp.eq.s32.totalorder %s22, 3
      %p181 = por %p179, %p180
      %p183 = scmp.ne.s32.totalorder %s168, %s182
      %p184 = scmp.eq.s32.totalorder %s22, 0
      %p185 = por %p183, %p184
      %s186 = ssub.s32 %s16, %s23
      %p187 = scmp.eq.s32.totalorder %s186, 0
      %s189 = sadd.s32 %s188, 1
      %s190 = scalar_select %p187, %s188, %s189
      %p193 = pneg %p187
      %p194 = scmp.eq.s32.totalorder %s16, 3
      %p195 = por %p193, %p194
      %p196 = scmp.ne.s32.totalorder %s188, %s191
      %p197 = scmp.eq.s32.totalorder %s16, 0
      %p198 = por %p196, %p197
      %p199 = scmp.ne.s32.totalorder %s188, %s191
      %p200 = scmp.eq.s32.totalorder %s21, 3
      %p201 = por %p199, %p200
      %p202 = scmp.ne.s32.totalorder %s191, %s192
      %p203 = scmp.eq.s32.totalorder %s21, 0
      %p204 = por %p202, %p203
      %p205 = scmp.ne.s32.totalorder %s191, %s192
      %p206 = scmp.eq.s32.totalorder %s22, 3
      %p207 = por %p205, %p206
      %p209 = scmp.ne.s32.totalorder %s192, %s208
      %p210 = scmp.eq.s32.totalorder %s22, 0
      %p211 = por %p209, %p210
      %p212 = scmp.le.s32.totalorder 1, %s16
      %p213 = scmp.lt.s32.totalorder %s16, 5
      %p214 = pnand %p212, %p213
      %p215 = pneg %p214
      // Predicated region
      $region9: #{tpu_custom_call.1} parent=5 // pred_check
        _
      $region10: #{tpu_custom_call.1} parent=5 // pred_check_branch
        %217 = sbr.rel (%p214) target = $region12
      $region11: #{tpu_custom_call.1} parent=5 // pred_region
        %s218 = ssub.s32 %s16, 1
        // Predicated region
        $region13: #{tpu_custom_call.1} parent=11 // pred_check
          %p219 = pneg %p63
        $region14: #{tpu_custom_call.1} parent=11 // pred_check_branch
          %221 = sbr.rel (%p219) target = $region16
        $region15: #{tpu_custom_call.1} parent=11 // pred_region
          _
        $region16: #{tpu_custom_call.1} parent=11 // pred_fallthru
          _
        // Predicated region
        $region17: #{tpu_custom_call.1} parent=11 // pred_check
          %p222 = pneg %p84
        $region18: #{tpu_custom_call.1} parent=11 // pred_check_branch
          %224 = sbr.rel (%p222) target = $region20
        $region19: #{tpu_custom_call.1} parent=11 // pred_region
          _
        $region20: #{tpu_custom_call.1} parent=11 // pred_fallthru
          _
        // Predicated region
        $region21: #{tpu_custom_call.1} parent=11 // pred_check
          %p225 = pneg %p157
        $region22: #{tpu_custom_call.1} parent=11 // pred_check_branch
          %227 = sbr.rel (%p225) target = $region24
        $region23: #{tpu_custom_call.1} parent=11 // pred_region
          _
        $region24: #{tpu_custom_call.1} parent=11 // pred_fallthru
          _
        // Predicated region
        $region25: #{tpu_custom_call.1} parent=11 // pred_check
          %p228 = pneg %p178
        $region26: #{tpu_custom_call.1} parent=11 // pred_check_branch
          %230 = sbr.rel (%p228) target = $region28
        $region27: #{tpu_custom_call.1} parent=11 // pred_region
          _
        $region28: #{tpu_custom_call.1} parent=11 // pred_fallthru
          _
      $region12: #{tpu_custom_call.1} parent=5 // pred_fallthru
        _
      %p231 = scmp.lt.s32.totalorder %s16, 4
      // Predicated region
      $region29: #{tpu_custom_call.1} parent=5 // pred_check
        %p232 = pneg %p231
      $region30: #{tpu_custom_call.1} parent=5 // pred_check_branch
        %234 = sbr.rel (%p232) target = $region32
      $region31: #{tpu_custom_call.1} parent=5 // pred_region
        // Predicated region
        $region33: #{tpu_custom_call.1} parent=31 // pred_check
          %p235 = pneg %p36
        $region34: #{tpu_custom_call.1} parent=31 // pred_check_branch
          %237 = sbr.rel (%p235) target = $region36
        $region35: #{tpu_custom_call.1} parent=31 // pred_region
          %s238 = smul.u32 8, %s16
          %p239 = scmp.lt.s32.totalorder %s238, 31
          %s240 = scalar_select %p239, %s238, 31
          %s241 = smul.addr %s240, 8
          %s242 = scalar_lea.vmem %s0, %s241
          %s243 = smul.u32 8, %s16
        $region36: #{tpu_custom_call.1} parent=31 // pred_fallthru
          _
        // Predicated region
        $region37: #{tpu_custom_call.1} parent=31 // pred_check
          %p244 = pneg %p104
        $region38: #{tpu_custom_call.1} parent=31 // pred_check_branch
          %246 = sbr.rel (%p244) target = $region40
        $region39: #{tpu_custom_call.1} parent=31 // pred_region
          %s247 = smul.u32 2, %s16
          %p248 = scmp.lt.s32.totalorder %s247, 7
          %s249 = scalar_select %p248, %s247, 7
          %s250 = smul.addr %s249, 2
          %s251 = smul.addr %s250, 8
          %s252 = scalar_lea.vmem %s3, %s251
          %s253 = smul.u32 2, %s16
        $region40: #{tpu_custom_call.1} parent=31 // pred_fallthru
          _
        // Predicated region
        $region41: #{tpu_custom_call.1} parent=31 // pred_check
          %p254 = pneg %p130
        $region42: #{tpu_custom_call.1} parent=31 // pred_check_branch
          %256 = sbr.rel (%p254) target = $region44
        $region43: #{tpu_custom_call.1} parent=31 // pred_region
          %s257 = smul.u32 8, %s16
          %p258 = scmp.lt.s32.totalorder %s257, 31
          %s259 = scalar_select %p258, %s257, 31
          %s260 = smul.addr %s259, 8
          %s261 = scalar_lea.vmem %s4, %s260
          %s262 = smul.u32 8, %s16
        $region44: #{tpu_custom_call.1} parent=31 // pred_fallthru
          _
      $region32: #{tpu_custom_call.1} parent=5 // pred_fallthru
        _
      %p263 = scmp.le.s32.totalorder 1, %s16
      %p264 = scmp.lt.s32.totalorder %s16, 5
      %p265 = pnand %p263, %p264
      %p266 = pneg %p265
      // Predicated region
      $region45: #{tpu_custom_call.1} parent=5 // pred_check
        _
      $region46: #{tpu_custom_call.1} parent=5 // pred_check_branch
        %268 = sbr.rel (%p265) target = $region48
      $region47: #{tpu_custom_call.1} parent=5 // pred_region
        %s269 = ssub.s32 %s16, 1
        %s270 = smul.u32 8, %s21
        %p271 = scmp.lt.s32.totalorder %s270, 31
        %s272 = scalar_select %p271, %s270, 31
        %s273 = smul.addr %s272, 8
        %s274 = scalar_lea.vmem %s0, %s273
        %p275 = pneg %p42
        %p276 = pneg %p39
        %p277 = pneg %p63
        %p278 = pneg %p60
        %p279 = pneg %p84
        %p280 = pneg %p81
        %s281 = smul.u32 2, %s21
        %p282 = scmp.lt.s32.totalorder %s281, 7
        %s283 = scalar_select %p282, %s281, 7
        %s284 = smul.addr %s283, 2
        %s285 = smul.addr %s284, 8
        %s286 = scalar_lea.vmem %s3, %s285
        %p287 = pneg %p110
        %p288 = pneg %p107
        %s289 = smul.u32 8, %s21
        %p290 = scmp.lt.s32.totalorder %s289, 31
        %s291 = scalar_select %p290, %s289, 31
        %s292 = smul.addr %s291, 8
        %s293 = scalar_lea.vmem %s4, %s292
        %p294 = pneg %p136
        %p295 = pneg %p133
        %p296 = pneg %p157
        %p297 = pneg %p154
        %p298 = pneg %p178
        %p299 = pneg %p175
        %p300 = pneg %p204
        %p301 = pneg %p201
        %s302 = sand.u32 %s191, 1
        %s303 = scalar_lea.sflag [#allocation3], %s302
        %s304 = sand.u32 %s191, 1
        %s305 = smul.addr %s304, 8
        %s306 = scalar_lea.vmem [#allocation2], %s305
        %s307 = smul.u32 8, %s21
        %p308 = scmp.lt.s32.totalorder %s307, 31
        %s309 = scalar_select %p308, %s307, 31
        %s310 = smul.addr %s309, 8
        %s311 = scalar_lea.vmem %s0, %s310
        %s312 = smul.u32 8, %s21
        %s313 = smul.u32 2, %s21
        %p314 = scmp.lt.s32.totalorder %s313, 7
        %s315 = scalar_select %p314, %s313, 7
        %s316 = smul.addr %s315, 2
        %s317 = smul.addr %s316, 8
        %s318 = scalar_lea.vmem %s3, %s317
        %s319 = smul.u32 2, %s21
        %s320 = smul.u32 8, %s21
        %p321 = scmp.lt.s32.totalorder %s320, 31
        %s322 = scalar_select %p321, %s320, 31
        %s323 = smul.addr %s322, 8
        %s324 = scalar_lea.vmem %s4, %s323
        %s325 = smul.u32 8, %s21
        %v326 = vld [vmem:[%s311] sm:$0xff]
        %v327 = vld [vmem:[%s311 + $0x8] sm:$0xff]
        %v328 = vld [vmem:[%s311 + $0x10] sm:$0xff]
        %v329 = vld [vmem:[%s311 + $0x18] sm:$0xff]
        %v330 = vld [vmem:[%s311 + $0x20] sm:$0xff]
        %v331 = vld [vmem:[%s311 + $0x28] sm:$0xff]
        %v332 = vld [vmem:[%s311 + $0x30] sm:$0xff]
        %v333 = vld [vmem:[%s311 + $0x38] sm:$0xff]
        %v334 = vld [vmem:[%s1] sm:$0xff]
        %v335 = vld [vmem:[%s1 + $0x8] sm:$0xff]
        %v336 = vld [vmem:[%s2] sm:$0x1]
        %v337 = vld [vmem:[%s318] sm:$0xff]
        %v338 = vld [vmem:[%s318 + $0x8] sm:$0xff]
        %v339 = vld [vmem:[%s318 + $0x10] sm:$0xff]
        %v340 = vld [vmem:[%s318 + $0x18] sm:$0xff]
        %v341 = vld [vmem:[%s324] sm:$0xff]
        %v342 = vld [vmem:[%s324 + $0x8] sm:$0xff]
        %v343 = vld [vmem:[%s324 + $0x10] sm:$0xff]
        %v344 = vld [vmem:[%s324 + $0x18] sm:$0xff]
        %v345 = vld [vmem:[%s324 + $0x20] sm:$0xff]
        %v346 = vld [vmem:[%s324 + $0x28] sm:$0xff]
        %v347 = vld [vmem:[%s324 + $0x30] sm:$0xff]
        %v348 = vld [vmem:[%s324 + $0x38] sm:$0xff]
        %v349 = vld [vmem:[%s5] sm:$0xff]
        %v350 = vld [vmem:[%s5 + $0x8] sm:$0xff]
        %v351 = vld [vmem:[%s6] sm:$0xff]
        %v352 = vld [vmem:[%s6 + $0x8] sm:$0xff]
        %v353 = vld [vmem:[%s6 + $0x10] sm:$0xff]
        %v354 = vld [vmem:[%s6 + $0x18] sm:$0xff]
        %v355 = vld [vmem:[%s6 + $0x20] sm:$0xff]
        %v356 = vld [vmem:[%s6 + $0x28] sm:$0xff]
        %v357 = vld [vmem:[%s6 + $0x30] sm:$0xff]
        %v358 = vld [vmem:[%s6 + $0x38] sm:$0xff]
        %v359 = vld [vmem:[%s6 + $0x40] sm:$0xff]
        %v360 = vld [vmem:[%s6 + $0x48] sm:$0xff]
        %v361 = vld [vmem:[%s6 + $0x50] sm:$0xff]
        %v362 = vld [vmem:[%s6 + $0x58] sm:$0xff]
        %v363 = vld [vmem:[%s6 + $0x60] sm:$0xff]
        %v364 = vld [vmem:[%s6 + $0x68] sm:$0xff]
        %v365 = vld [vmem:[%s6 + $0x70] sm:$0xff]
        %v366 = vld [vmem:[%s6 + $0x78] sm:$0xff]
        %v367 = vld [vmem:[%s6 + $0x80] sm:$0xff]
        %v368 = vld [vmem:[%s6 + $0x88] sm:$0xff]
        %v369 = vld [vmem:[%s6 + $0x90] sm:$0xff]
        %v370 = vld [vmem:[%s6 + $0x98] sm:$0xff]
        %v371 = vld [vmem:[%s6 + $0xa0] sm:$0xff]
        %v372 = vld [vmem:[%s6 + $0xa8] sm:$0xff]
        %v373 = vld [vmem:[%s6 + $0xb0] sm:$0xff]
        %v374 = vld [vmem:[%s6 + $0xb8] sm:$0xff]
        %v375 = vld [vmem:[%s6 + $0xc0] sm:$0xff]
        %v376 = vld [vmem:[%s6 + $0xc8] sm:$0xff]
        %v377 = vld [vmem:[%s6 + $0xd0] sm:$0xff]
        %v378 = vld [vmem:[%s6 + $0xd8] sm:$0xff]
        %v379 = vld [vmem:[%s6 + $0xe0] sm:$0xff]
        %v380 = vld [vmem:[%s6 + $0xe8] sm:$0xff]
        %v381 = vld [vmem:[%s6 + $0xf0] sm:$0xff]
        %v382 = vld [vmem:[%s6 + $0xf8] sm:$0xff]
        %v384 = vlaneseq
        %v385 = vshrl.u32 %v384, 7
        %v386 = vsub.s32 0, %v385
        %v387 = vrot.slane %v336, %v386
        %vm389 = vcmask 130048
        %v391 = vsel %vm389, %v326, 0
        %v394 = vsel %vm389, %v327, 0
        %v397 = vsel %vm389, %v328, 0
        %v400 = vsel %vm389, %v329, 0
        %v403 = vsel %vm389, %v330, 0
        %v406 = vsel %vm389, %v331, 0
        %v409 = vsel %vm389, %v332, 0
        %v412 = vsel %vm389, %v333, 0
        %414 = vmatprep.subr.mxu0 0.0
        %415 = vmatpush1.msra.mxu0 0.0
        %416 = vmatprep.subr.mxu0 0.0
        %417 = vmatpush1.msra.mxu0 0.0
        %418 = vmatprep.subr.mxu0 0.0
        %419 = vmatpush1.msra.mxu0 0.0
        %420 = vmatprep.subr.mxu0 0.0
        %421 = vmatpush1.msra.mxu0 0.0
        %422 = vmatprep.subr.mxu0 0.0
        %423 = vmatpush1.msra.mxu0 0.0
        %424 = vmatprep.subr.mxu0 0.0
        %425 = vmatpush1.msra.mxu0 0.0
        %426 = vmatprep.subr.mxu0 0.0
        %427 = vmatpush1.msra.mxu0 0.0
        %428 = vmatprep.subr.mxu0 0.0
        %429 = vmatpush1.msra.mxu0 0.0
        %430 = vmatprep.subr.mxu0 0.0
        %431 = vmatpush1.msra.mxu0 0.0
        %432 = vmatprep.subr.mxu0 0.0
        %433 = vmatpush1.msra.mxu0 0.0
        %434 = vmatprep.subr.mxu0 0.0
        %435 = vmatpush1.msra.mxu0 0.0
        %436 = vmatprep.subr.mxu0 0.0
        %437 = vmatpush1.msra.mxu0 0.0
        %438 = vmatprep.subr.mxu0 0.0
        %439 = vmatpush1.msra.mxu0 0.0
        %440 = vmatprep.subr.mxu0 0.0
        %441 = vmatpush1.msra.mxu0 0.0
        %442 = vmatprep.subr.mxu0 0.0
        %443 = vmatpush1.msra.mxu0 %v335
        %444 = vmatprep.subr.mxu0 0.0
        %445 = vmatpush1.msra.mxu0 %v334
        %446 = vmatprep.subr.mxu0 0.0
        %447 = vmatpush2.msra.mxu0 0.0
        %448 = vmatprep.subr.mxu0 0.0
        %449 = vmatpush2.msra.mxu0 0.0
        %450 = vmatprep.subr.mxu0 0.0
        %451 = vmatpush2.msra.mxu0 0.0
        %452 = vmatprep.subr.mxu0 0.0
        %453 = vmatpush2.msra.mxu0 0.0
        %454 = vmatprep.subr.mxu0 0.0
        %455 = vmatpush2.msra.mxu0 0.0
        %456 = vmatprep.subr.mxu0 0.0
        %457 = vmatpush2.msra.mxu0 0.0
        %458 = vmatprep.subr.mxu0 0.0
        %459 = vmatpush2.msra.mxu0 0.0
        %460 = vmatprep.subr.mxu0 0.0
        %461 = vmatpush2.msra.mxu0 0.0
        %462 = vmatprep.subr.mxu0 0.0
        %463 = vmatpush2.msra.mxu0 0.0
        %464 = vmatprep.subr.mxu0 0.0
        %465 = vmatpush2.msra.mxu0 0.0
        %466 = vmatprep.subr.mxu0 0.0
        %467 = vmatpush2.msra.mxu0 0.0
        %468 = vmatprep.subr.mxu0 0.0
        %469 = vmatpush2.msra.mxu0 0.0
        %470 = vmatprep.subr.mxu0 0.0
        %471 = vmatpush2.msra.mxu0 0.0
        %472 = vmatprep.subr.mxu0 0.0
        %473 = vmatpush2.msra.mxu0 0.0
        %474 = vmatprep.subr.mxu0 0.0
        %475 = vmatpush2.msra.mxu0 0.0
        %476 = vmatprep.subr.mxu0 0.0
        %477 = vmatpush2.msra.mxu0 0.0
        %478 = vmatprep.mubr.f32.mxu0 0.0
        %479 = vmatmul.mubr.f32.gmra.mxu0 %v391
        %v480 = vpop.f32.mrf.mxu0
        %v481 = vadd.f32 %v387, %v480
        %v482 = vpop.f32.mrf.mxu0
        %483 = vmatprep.mubr.f32.mxu0 0.0
        %484 = vmatmul.mubr.f32.gmra.mxu0 %v394
        %v485 = vpop.f32.mrf.mxu0
        %v486 = vadd.f32 %v387, %v485
        %v487 = vpop.f32.mrf.mxu0
        %488 = vmatprep.mubr.f32.mxu0 0.0
        %489 = vmatmul.mubr.f32.gmra.mxu0 %v397
        %v490 = vpop.f32.mrf.mxu0
        %v491 = vadd.f32 %v387, %v490
        %v492 = vpop.f32.mrf.mxu0
        %493 = vmatprep.mubr.f32.mxu0 0.0
        %494 = vmatmul.mubr.f32.gmra.mxu0 %v400
        %v495 = vpop.f32.mrf.mxu0
        %v496 = vadd.f32 %v387, %v495
        %v497 = vpop.f32.mrf.mxu0
        %498 = vmatprep.mubr.f32.mxu0 0.0
        %499 = vmatmul.mubr.f32.gmra.mxu0 %v403
        %v500 = vpop.f32.mrf.mxu0
        %v501 = vadd.f32 %v387, %v500
        %v502 = vpop.f32.mrf.mxu0
        %503 = vmatprep.mubr.f32.mxu0 0.0
        %504 = vmatmul.mubr.f32.gmra.mxu0 %v406
        %v505 = vpop.f32.mrf.mxu0
        %v506 = vadd.f32 %v387, %v505
        %v507 = vpop.f32.mrf.mxu0
        %508 = vmatprep.mubr.f32.mxu0 0.0
        %509 = vmatmul.mubr.f32.gmra.mxu0 %v409
        %v510 = vpop.f32.mrf.mxu0
        %v511 = vadd.f32 %v387, %v510
        %v512 = vpop.f32.mrf.mxu0
        %513 = vmatprep.mubr.f32.mxu0 0.0
        %514 = vmatmul.mubr.f32.gmra.mxu0 %v412
        %v515 = vpop.f32.mrf.mxu0
        %v516 = vadd.f32 %v387, %v515
        %v517 = vpop.f32.mrf.mxu0
        %518 = vdwg.mxu0
        %vm519 = vcmask 64512
        %v520 = vsel %vm519, %v341, -inf
        %521 = vmax.xlane.f32.xlu0 %v520
        %v522 = vpop.xlane.xlu0 %521
        %v523 = vsel %vm519, %v342, -inf
        %524 = vmax.xlane.f32.xlu0 %v523
        %v525 = vpop.xlane.xlu0 %524
        %v526 = vsel %vm519, %v343, -inf
        %527 = vmax.xlane.f32.xlu0 %v526
        %v528 = vpop.xlane.xlu0 %527
        %v529 = vsel %vm519, %v344, -inf
        %530 = vmax.xlane.f32.xlu0 %v529
        %v531 = vpop.xlane.xlu0 %530
        %v532 = vsel %vm519, %v345, -inf
        %533 = vmax.xlane.f32.xlu0 %v532
        %v534 = vpop.xlane.xlu0 %533
        %v535 = vsel %vm519, %v346, -inf
        %536 = vmax.xlane.f32.xlu0 %v535
        %v537 = vpop.xlane.xlu0 %536
        %v538 = vsel %vm519, %v347, -inf
        %539 = vmax.xlane.f32.xlu0 %v538
        %v540 = vpop.xlane.xlu0 %539
        %v541 = vsel %vm519, %v348, -inf
        %542 = vmax.xlane.f32.xlu0 %v541
        %v543 = vpop.xlane.xlu0 %542
        %v544 = vsub.f32 %v341, %v522
        %v545 = vsub.f32 %v342, %v525
        %v546 = vsub.f32 %v343, %v528
        %v547 = vsub.f32 %v344, %v531
        %v548 = vsub.f32 %v345, %v534
        %v549 = vsub.f32 %v346, %v537
        %v550 = vsub.f32 %v347, %v540
        %v551 = vsub.f32 %v348, %v543
        %v552 = vmul.f32 %v544, 1.442695
        %v553 = vpow.pop %v552
        %v554 = vmul.f32 %v545, 1.442695
        %v555 = vpow.pop %v554
        %v556 = vmul.f32 %v546, 1.442695
        %v557 = vpow.pop %v556
        %v558 = vmul.f32 %v547, 1.442695
        %v559 = vpow.pop %v558
        %v560 = vmul.f32 %v548, 1.442695
        %v561 = vpow.pop %v560
        %v562 = vmul.f32 %v549, 1.442695
        %v563 = vpow.pop %v562
        %v564 = vmul.f32 %v550, 1.442695
        %v565 = vpow.pop %v564
        %v566 = vmul.f32 %v551, 1.442695
        %v567 = vpow.pop %v566
        %v568 = vsel %vm519, %v553, 0.0
        %569 = vadd.xlane.f32.xlu0 %v568
        %v570 = vpop.xlane.xlu0 %569
        %v571 = vsel %vm519, %v555, 0.0
        %572 = vadd.xlane.f32.xlu0 %v571
        %v573 = vpop.xlane.xlu0 %572
        %v574 = vsel %vm519, %v557, 0.0
        %575 = vadd.xlane.f32.xlu0 %v574
        %v576 = vpop.xlane.xlu0 %575
        %v577 = vsel %vm519, %v559, 0.0
        %578 = vadd.xlane.f32.xlu0 %v577
        %v579 = vpop.xlane.xlu0 %578
        %v580 = vsel %vm519, %v561, 0.0
        %581 = vadd.xlane.f32.xlu0 %v580
        %v582 = vpop.xlane.xlu0 %581
        %v583 = vsel %vm519, %v563, 0.0
        %584 = vadd.xlane.f32.xlu0 %v583
        %v585 = vpop.xlane.xlu0 %584
        %v586 = vsel %vm519, %v565, 0.0
        %587 = vadd.xlane.f32.xlu0 %v586
        %v588 = vpop.xlane.xlu0 %587
        %v589 = vsel %vm519, %v567, 0.0
        %590 = vadd.xlane.f32.xlu0 %v589
        %v591 = vpop.xlane.xlu0 %590
        %v592 = vrcp.pop %v570
        %v593 = vrcp.pop %v573
        %v594 = vrcp.pop %v576
        %v595 = vrcp.pop %v579
        %v596 = vrcp.pop %v582
        %v597 = vrcp.pop %v585
        %v598 = vrcp.pop %v588
        %v599 = vrcp.pop %v591
        %v600 = vmul.f32 %v570, %v592
        %v601 = vmul.f32 %v573, %v593
        %v602 = vmul.f32 %v576, %v594
        %v603 = vmul.f32 %v579, %v595
        %v604 = vmul.f32 %v582, %v596
        %v605 = vmul.f32 %v585, %v597
        %v606 = vmul.f32 %v588, %v598
        %v607 = vmul.f32 %v591, %v599
        %v608 = vsub.f32 2.0, %v600
        %v609 = vsub.f32 2.0, %v601
        %v610 = vsub.f32 2.0, %v602
        %v611 = vsub.f32 2.0, %v603
        %v612 = vsub.f32 2.0, %v604
        %v613 = vsub.f32 2.0, %v605
        %v614 = vsub.f32 2.0, %v606
        %v615 = vsub.f32 2.0, %v607
        %v616 = vmul.f32 %v592, %v608
        %v617 = vmul.f32 %v593, %v609
        %v618 = vmul.f32 %v594, %v610
        %v619 = vmul.f32 %v595, %v611
        %v620 = vmul.f32 %v596, %v612
        %v621 = vmul.f32 %v597, %v613
        %v622 = vmul.f32 %v598, %v614
        %v623 = vmul.f32 %v599, %v615
        %v624 = vmul.f32 %v553, %v616
        %v625 = vmul.f32 %v555, %v617
        %v626 = vmul.f32 %v557, %v618
        %v627 = vmul.f32 %v559, %v619
        %v628 = vmul.f32 %v561, %v620
        %v629 = vmul.f32 %v563, %v621
        %v630 = vmul.f32 %v565, %v622
        %v631 = vmul.f32 %v567, %v623
        %v633 = vsel %vm519, %v624, 0
        %v636 = vsel %vm519, %v625, 0
        %v639 = vsel %vm519, %v626, 0
        %v642 = vsel %vm519, %v627, 0
        %v645 = vsel %vm519, %v628, 0
        %v648 = vsel %vm519, %v629, 0
        %v651 = vsel %vm519, %v630, 0
        %v654 = vsel %vm519, %v631, 0
        %656 = vmatprep.subr.mxu0 0.0
        %657 = vmatpush1.msra.mxu0 0.0
        %658 = vmatprep.subr.mxu0 0.0
        %659 = vmatpush1.msra.mxu0 0.0
        %660 = vmatprep.subr.mxu0 0.0
        %661 = vmatpush1.msra.mxu0 0.0
        %662 = vmatprep.subr.mxu0 0.0
        %663 = vmatpush1.msra.mxu0 0.0
        %664 = vmatprep.subr.mxu0 0.0
        %665 = vmatpush1.msra.mxu0 0.0
        %666 = vmatprep.subr.mxu0 0.0
        %667 = vmatpush1.msra.mxu0 0.0
        %668 = vmatprep.subr.mxu0 0.0
        %669 = vmatpush1.msra.mxu0 0.0
        %670 = vmatprep.subr.mxu0 0.0
        %671 = vmatpush1.msra.mxu0 0.0
        %672 = vmatprep.subr.mxu0 0.0
        %673 = vmatpush1.msra.mxu0 0.0
        %674 = vmatprep.subr.mxu0 0.0
        %675 = vmatpush1.msra.mxu0 0.0
        %676 = vmatprep.subr.mxu0 0.0
        %677 = vmatpush1.msra.mxu0 0.0
        %678 = vmatprep.subr.mxu0 0.0
        %679 = vmatpush1.msra.mxu0 0.0
        %680 = vmatprep.subr.mxu0 0.0
        %681 = vmatpush1.msra.mxu0 0.0
        %682 = vmatprep.subr.mxu0 0.0
        %683 = vmatpush1.msra.mxu0 0.0
        %684 = vmatprep.subr.mxu0 0.0
        %685 = vmatpush1.msra.mxu0 0.0
        %686 = vmatprep.subr.mxu0 %v350
        %687 = vmatpush1.msra.mxu0 %v349
        %688 = vmatprep.subr.mxu0 0.0
        %689 = vmatpush2.msra.mxu0 0.0
        %690 = vmatprep.subr.mxu0 0.0
        %691 = vmatpush2.msra.mxu0 0.0
        %692 = vmatprep.subr.mxu0 0.0
        %693 = vmatpush2.msra.mxu0 0.0
        %694 = vmatprep.subr.mxu0 0.0
        %695 = vmatpush2.msra.mxu0 0.0
        %696 = vmatprep.subr.mxu0 0.0
        %697 = vmatpush2.msra.mxu0 0.0
        %698 = vmatprep.subr.mxu0 0.0
        %699 = vmatpush2.msra.mxu0 0.0
        %700 = vmatprep.subr.mxu0 0.0
        %701 = vmatpush2.msra.mxu0 0.0
        %702 = vmatprep.subr.mxu0 0.0
        %703 = vmatpush2.msra.mxu0 0.0
        %704 = vmatprep.subr.mxu0 0.0
        %705 = vmatpush2.msra.mxu0 0.0
        %706 = vmatprep.subr.mxu0 0.0
        %707 = vmatpush2.msra.mxu0 0.0
        %708 = vmatprep.subr.mxu0 0.0
        %709 = vmatpush2.msra.mxu0 0.0
        %710 = vmatprep.subr.mxu0 0.0
        %711 = vmatpush2.msra.mxu0 0.0
        %712 = vmatprep.subr.mxu0 0.0
        %713 = vmatpush2.msra.mxu0 0.0
        %714 = vmatprep.subr.mxu0 0.0
        %715 = vmatpush2.msra.mxu0 0.0
        %716 = vmatprep.subr.mxu0 0.0
        %717 = vmatpush2.msra.mxu0 0.0
        %718 = vmatprep.subr.mxu0 0.0
        %719 = vmatpush2.msra.mxu0 0.0
        %720 = vmatprep.mubr.f32.mxu0 0.0
        %721 = vmatmul.mubr.f32.gmra.mxu0 %v633
        %v722 = vpop.f32.mrf.mxu0
        %v723 = vadd.f32 0.0, %v722
        %v724 = vpop.f32.mrf.mxu0
        %v725 = vadd.f32 0.0, %v724
        %726 = vmatprep.mubr.f32.mxu0 0.0
        %727 = vmatmul.mubr.f32.gmra.mxu0 %v636
        %v728 = vpop.f32.mrf.mxu0
        %v729 = vadd.f32 0.0, %v728
        %v730 = vpop.f32.mrf.mxu0
        %v731 = vadd.f32 0.0, %v730
        %732 = vmatprep.mubr.f32.mxu0 0.0
        %733 = vmatmul.mubr.f32.gmra.mxu0 %v639
        %v734 = vpop.f32.mrf.mxu0
        %v735 = vadd.f32 0.0, %v734
        %v736 = vpop.f32.mrf.mxu0
        %v737 = vadd.f32 0.0, %v736
        %738 = vmatprep.mubr.f32.mxu0 0.0
        %739 = vmatmul.mubr.f32.gmra.mxu0 %v642
        %v740 = vpop.f32.mrf.mxu0
        %v741 = vadd.f32 0.0, %v740
        %v742 = vpop.f32.mrf.mxu0
        %v743 = vadd.f32 0.0, %v742
        %744 = vmatprep.mubr.f32.mxu0 0.0
        %745 = vmatmul.mubr.f32.gmra.mxu0 %v645
        %v746 = vpop.f32.mrf.mxu0
        %v747 = vadd.f32 0.0, %v746
        %v748 = vpop.f32.mrf.mxu0
        %v749 = vadd.f32 0.0, %v748
        %750 = vmatprep.mubr.f32.mxu0 0.0
        %751 = vmatmul.mubr.f32.gmra.mxu0 %v648
        %v752 = vpop.f32.mrf.mxu0
        %v753 = vadd.f32 0.0, %v752
        %v754 = vpop.f32.mrf.mxu0
        %v755 = vadd.f32 0.0, %v754
        %756 = vmatprep.mubr.f32.mxu0 0.0
        %757 = vmatmul.mubr.f32.gmra.mxu0 %v651
        %v758 = vpop.f32.mrf.mxu0
        %v759 = vadd.f32 0.0, %v758
        %v760 = vpop.f32.mrf.mxu0
        %v761 = vadd.f32 0.0, %v760
        %762 = vmatprep.mubr.f32.mxu0 0.0
        %763 = vmatmul.mubr.f32.gmra.mxu0 %v654
        %v764 = vpop.f32.mrf.mxu0
        %v765 = vadd.f32 0.0, %v764
        %v766 = vpop.f32.mrf.mxu0
        %v767 = vadd.f32 0.0, %v766
        %768 = vdwg.mxu0
        %v769 = vunpack.c.0.s8 %v337
        %v770 = vunpack.c.0.s8 %v338
        %v771 = vunpack.c.1.s8 %v337
        %v772 = vunpack.c.1.s8 %v338
        %v773 = vunpack.c.2.s8 %v337
        %v774 = vunpack.c.2.s8 %v338
        %v775 = vunpack.c.3.s8 %v337
        %v776 = vunpack.c.3.s8 %v338
        %v777 = vunpack.c.0.s8 %v339
        %v778 = vunpack.c.0.s8 %v340
        %v779 = vunpack.c.1.s8 %v339
        %v780 = vunpack.c.1.s8 %v340
        %v781 = vunpack.c.2.s8 %v339
        %v782 = vunpack.c.2.s8 %v340
        %v783 = vunpack.c.3.s8 %v339
        %v784 = vunpack.c.3.s8 %v340
        %v785 = vcvt.s32.f32 %v769
        %v786 = vcvt.s32.f32 %v770
        %v787 = vcvt.s32.f32 %v771
        %v788 = vcvt.s32.f32 %v772
        %v789 = vcvt.s32.f32 %v773
        %v790 = vcvt.s32.f32 %v774
        %v791 = vcvt.s32.f32 %v775
        %v792 = vcvt.s32.f32 %v776
        %v793 = vcvt.s32.f32 %v777
        %v794 = vcvt.s32.f32 %v778
        %v795 = vcvt.s32.f32 %v779
        %v796 = vcvt.s32.f32 %v780
        %v797 = vcvt.s32.f32 %v781
        %v798 = vcvt.s32.f32 %v782
        %v799 = vcvt.s32.f32 %v783
        %v800 = vcvt.s32.f32 %v784
        %v801 = vmul.f32 %v785, %v723
        %v802 = vmul.f32 %v786, %v725
        %v803 = vmul.f32 %v787, %v729
        %v804 = vmul.f32 %v788, %v731
        %v805 = vmul.f32 %v789, %v735
        %v806 = vmul.f32 %v790, %v737
        %v807 = vmul.f32 %v791, %v741
        %v808 = vmul.f32 %v792, %v743
        %v809 = vmul.f32 %v793, %v747
        %v810 = vmul.f32 %v794, %v749
        %v811 = vmul.f32 %v795, %v753
        %v812 = vmul.f32 %v796, %v755
        %v813 = vmul.f32 %v797, %v759
        %v814 = vmul.f32 %v798, %v761
        %v815 = vmul.f32 %v799, %v765
        %v816 = vmul.f32 %v800, %v767
        %817 = vmatprep.subr.mxu0 0.0
        %818 = vmatpush1.msra.mxu0 %v366
        %819 = vmatprep.subr.mxu0 0.0
        %820 = vmatpush1.msra.mxu0 %v365
        %821 = vmatprep.subr.mxu0 0.0
        %822 = vmatpush1.msra.mxu0 %v364
        %823 = vmatprep.subr.mxu0 0.0
        %824 = vmatpush1.msra.mxu0 %v363
        %825 = vmatprep.subr.mxu0 0.0
        %826 = vmatpush1.msra.mxu0 %v362
        %827 = vmatprep.subr.mxu0 0.0
        %828 = vmatpush1.msra.mxu0 %v361
        %829 = vmatprep.subr.mxu0 0.0
        %830 = vmatpush1.msra.mxu0 %v360
        %831 = vmatprep.subr.mxu0 0.0
        %832 = vmatpush1.msra.mxu0 %v359
        %833 = vmatprep.subr.mxu0 0.0
        %834 = vmatpush1.msra.mxu0 %v358
        %835 = vmatprep.subr.mxu0 0.0
        %836 = vmatpush1.msra.mxu0 %v357
        %837 = vmatprep.subr.mxu0 0.0
        %838 = vmatpush1.msra.mxu0 %v356
        %839 = vmatprep.subr.mxu0 0.0
        %840 = vmatpush1.msra.mxu0 %v355
        %841 = vmatprep.subr.mxu0 0.0
        %842 = vmatpush1.msra.mxu0 %v354
        %843 = vmatprep.subr.mxu0 0.0
        %844 = vmatpush1.msra.mxu0 %v353
        %845 = vmatprep.subr.mxu0 0.0
        %846 = vmatpush1.msra.mxu0 %v352
        %847 = vmatprep.subr.mxu0 0.0
        %848 = vmatpush1.msra.mxu0 %v351
        %849 = vmatprep.subr.mxu0 0.0
        %850 = vmatpush2.msra.mxu0 %v382
        %851 = vmatprep.subr.mxu0 0.0
        %852 = vmatpush2.msra.mxu0 %v381
        %853 = vmatprep.subr.mxu0 0.0
        %854 = vmatpush2.msra.mxu0 %v380
        %855 = vmatprep.subr.mxu0 0.0
        %856 = vmatpush2.msra.mxu0 %v379
        %857 = vmatprep.subr.mxu0 0.0
        %858 = vmatpush2.msra.mxu0 %v378
        %859 = vmatprep.subr.mxu0 0.0
        %860 = vmatpush2.msra.mxu0 %v377
        %861 = vmatprep.subr.mxu0 0.0
        %862 = vmatpush2.msra.mxu0 %v376
        %863 = vmatprep.subr.mxu0 0.0
        %864 = vmatpush2.msra.mxu0 %v375
        %865 = vmatprep.subr.mxu0 0.0
        %866 = vmatpush2.msra.mxu0 %v374
        %867 = vmatprep.subr.mxu0 0.0
        %868 = vmatpush2.msra.mxu0 %v373
        %869 = vmatprep.subr.mxu0 0.0
        %870 = vmatpush2.msra.mxu0 %v372
        %871 = vmatprep.subr.mxu0 0.0
        %872 = vmatpush2.msra.mxu0 %v371
        %873 = vmatprep.subr.mxu0 0.0
        %874 = vmatpush2.msra.mxu0 %v370
        %875 = vmatprep.subr.mxu0 0.0
        %876 = vmatpush2.msra.mxu0 %v369
        %877 = vmatprep.subr.mxu0 0.0
        %878 = vmatpush2.msra.mxu0 %v368
        %879 = vmatprep.subr.mxu0 0.0
        %880 = vmatpush2.msra.mxu0 %v367
        %881 = vmatprep.mubr.f32.mxu0 %v802
        %882 = vmatmul.mubr.f32.gmra.mxu0 %v801
        %v883 = vpop.f32.mrf.mxu0
        %v884 = vadd.f32 0.0, %v883
        %v885 = vpop.f32.mrf.mxu0
        %886 = vmatprep.mubr.f32.mxu0 %v804
        %887 = vmatmul.mubr.f32.gmra.mxu0 %v803
        %v888 = vpop.f32.mrf.mxu0
        %v889 = vadd.f32 0.0, %v888
        %v890 = vpop.f32.mrf.mxu0
        %891 = vmatprep.mubr.f32.mxu0 %v806
        %892 = vmatmul.mubr.f32.gmra.mxu0 %v805
        %v893 = vpop.f32.mrf.mxu0
        %v894 = vadd.f32 0.0, %v893
        %v895 = vpop.f32.mrf.mxu0
        %896 = vmatprep.mubr.f32.mxu0 %v808
        %897 = vmatmul.mubr.f32.gmra.mxu0 %v807
        %v898 = vpop.f32.mrf.mxu0
        %v899 = vadd.f32 0.0, %v898
        %v900 = vpop.f32.mrf.mxu0
        %901 = vmatprep.mubr.f32.mxu0 %v810
        %902 = vmatmul.mubr.f32.gmra.mxu0 %v809
        %v903 = vpop.f32.mrf.mxu0
        %v904 = vadd.f32 0.0, %v903
        %v905 = vpop.f32.mrf.mxu0
        %906 = vmatprep.mubr.f32.mxu0 %v812
        %907 = vmatmul.mubr.f32.gmra.mxu0 %v811
        %v908 = vpop.f32.mrf.mxu0
        %v909 = vadd.f32 0.0, %v908
        %v910 = vpop.f32.mrf.mxu0
        %911 = vmatprep.mubr.f32.mxu0 %v814
        %912 = vmatmul.mubr.f32.gmra.mxu0 %v813
        %v913 = vpop.f32.mrf.mxu0
        %v914 = vadd.f32 0.0, %v913
        %v915 = vpop.f32.mrf.mxu0
        %916 = vmatprep.mubr.f32.mxu0 %v816
        %917 = vmatmul.mubr.f32.gmra.mxu0 %v815
        %v918 = vpop.f32.mrf.mxu0
        %v919 = vadd.f32 0.0, %v918
        %v920 = vpop.f32.mrf.mxu0
        %921 = vdwg.mxu0
        %v922 = vmax.f32 %v884, 0.01
        %v923 = vmax.f32 %v889, 0.01
        %v924 = vmax.f32 %v894, 0.01
        %v925 = vmax.f32 %v899, 0.01
        %v926 = vmax.f32 %v904, 0.01
        %v927 = vmax.f32 %v909, 0.01
        %v928 = vmax.f32 %v914, 0.01
        %v929 = vmax.f32 %v919, 0.01
        %v930 = vmin.f32 %v922, 0.99
        %v931 = vmin.f32 %v923, 0.99
        %v932 = vmin.f32 %v924, 0.99
        %v933 = vmin.f32 %v925, 0.99
        %v934 = vmin.f32 %v926, 0.99
        %v935 = vmin.f32 %v927, 0.99
        %v936 = vmin.f32 %v928, 0.99
        %v937 = vmin.f32 %v929, 0.99
        %v938 = vmax.f32 %v481, 0.0
        %v939 = vmax.f32 %v486, 0.0
        %v940 = vmax.f32 %v491, 0.0
        %v941 = vmax.f32 %v496, 0.0
        %v942 = vmax.f32 %v501, 0.0
        %v943 = vmax.f32 %v506, 0.0
        %v944 = vmax.f32 %v511, 0.0
        %v945 = vmax.f32 %v516, 0.0
        %v946 = vand.u32 2147483647, %v481
        %v947 = vand.u32 2147483647, %v486
        %v948 = vand.u32 2147483647, %v491
        %v949 = vand.u32 2147483647, %v496
        %v950 = vand.u32 2147483647, %v501
        %v951 = vand.u32 2147483647, %v506
        %v952 = vand.u32 2147483647, %v511
        %v953 = vand.u32 2147483647, %v516
        %v954 = vsub.f32 0.0, %v946
        %v955 = vsub.f32 0.0, %v947
        %v956 = vsub.f32 0.0, %v948
        %v957 = vsub.f32 0.0, %v949
        %v958 = vsub.f32 0.0, %v950
        %v959 = vsub.f32 0.0, %v951
        %v960 = vsub.f32 0.0, %v952
        %v961 = vsub.f32 0.0, %v953
        %v962 = vmul.f32 %v954, 1.442695
        %v963 = vpow.pop %v962
        %v964 = vmul.f32 %v955, 1.442695
        %v965 = vpow.pop %v964
        %v966 = vmul.f32 %v956, 1.442695
        %v967 = vpow.pop %v966
        %v968 = vmul.f32 %v957, 1.442695
        %v969 = vpow.pop %v968
        %v970 = vmul.f32 %v958, 1.442695
        %v971 = vpow.pop %v970
        %v972 = vmul.f32 %v959, 1.442695
        %v973 = vpow.pop %v972
        %v974 = vmul.f32 %v960, 1.442695
        %v975 = vpow.pop %v974
        %v976 = vmul.f32 %v961, 1.442695
        %v977 = vpow.pop %v976
        %v978 = vadd.f32 %v963, 1.0
        %v979 = vlog2.pop %v978
        %v980 = vmul.f32 %v979, 0.6931472
        %v981 = vmul.f32 -0.5, %v963
        %v982 = vadd.f32 %v981, 1.0
        %v983 = vmul.f32 %v982, %v963
        %v984 = vand.u32 2147483647, %v963
        %vm985 = vcmp.lt.f32.partialorder %v984, 0.0004427343
        %v986 = vsel %vm985, %v983, %v980
        %v987 = vadd.f32 %v965, 1.0
        %v988 = vlog2.pop %v987
        %v989 = vmul.f32 %v988, 0.6931472
        %v990 = vmul.f32 -0.5, %v965
        %v991 = vadd.f32 %v990, 1.0
        %v992 = vmul.f32 %v991, %v965
        %v993 = vand.u32 2147483647, %v965
        %vm994 = vcmp.lt.f32.partialorder %v993, 0.0004427343
        %v995 = vsel %vm994, %v992, %v989
        %v996 = vadd.f32 %v967, 1.0
        %v997 = vlog2.pop %v996
        %v998 = vmul.f32 %v997, 0.6931472
        %v999 = vmul.f32 -0.5, %v967
        %v1000 = vadd.f32 %v999, 1.0
        %v1001 = vmul.f32 %v1000, %v967
        %v1002 = vand.u32 2147483647, %v967
        %vm1003 = vcmp.lt.f32.partialorder %v1002, 0.0004427343
        %v1004 = vsel %vm1003, %v1001, %v998
        %v1005 = vadd.f32 %v969, 1.0
        %v1006 = vlog2.pop %v1005
        %v1007 = vmul.f32 %v1006, 0.6931472
        %v1008 = vmul.f32 -0.5, %v969
        %v1009 = vadd.f32 %v1008, 1.0
        %v1010 = vmul.f32 %v1009, %v969
        %v1011 = vand.u32 2147483647, %v969
        %vm1012 = vcmp.lt.f32.partialorder %v1011, 0.0004427343
        %v1013 = vsel %vm1012, %v1010, %v1007
        %v1014 = vadd.f32 %v971, 1.0
        %v1015 = vlog2.pop %v1014
        %v1016 = vmul.f32 %v1015, 0.6931472
        %v1017 = vmul.f32 -0.5, %v971
        %v1018 = vadd.f32 %v1017, 1.0
        %v1019 = vmul.f32 %v1018, %v971
        %v1020 = vand.u32 2147483647, %v971
        %vm1021 = vcmp.lt.f32.partialorder %v1020, 0.0004427343
        %v1022 = vsel %vm1021, %v1019, %v1016
        %v1023 = vadd.f32 %v973, 1.0
        %v1024 = vlog2.pop %v1023
        %v1025 = vmul.f32 %v1024, 0.6931472
        %v1026 = vmul.f32 -0.5, %v973
        %v1027 = vadd.f32 %v1026, 1.0
        %v1028 = vmul.f32 %v1027, %v973
        %v1029 = vand.u32 2147483647, %v973
        %vm1030 = vcmp.lt.f32.partialorder %v1029, 0.0004427343
        %v1031 = vsel %vm1030, %v1028, %v1025
        %v1032 = vadd.f32 %v975, 1.0
        %v1033 = vlog2.pop %v1032
        %v1034 = vmul.f32 %v1033, 0.6931472
        %v1035 = vmul.f32 -0.5, %v975
        %v1036 = vadd.f32 %v1035, 1.0
        %v1037 = vmul.f32 %v1036, %v975
        %v1038 = vand.u32 2147483647, %v975
        %vm1039 = vcmp.lt.f32.partialorder %v1038, 0.0004427343
        %v1040 = vsel %vm1039, %v1037, %v1034
        %v1041 = vadd.f32 %v977, 1.0
        %v1042 = vlog2.pop %v1041
        %v1043 = vmul.f32 %v1042, 0.6931472
        %v1044 = vmul.f32 -0.5, %v977
        %v1045 = vadd.f32 %v1044, 1.0
        %v1046 = vmul.f32 %v1045, %v977
        %v1047 = vand.u32 2147483647, %v977
        %vm1048 = vcmp.lt.f32.partialorder %v1047, 0.0004427343
        %v1049 = vsel %vm1048, %v1046, %v1043
        %v1050 = vadd.f32 %v938, %v986
        %v1051 = vadd.f32 %v939, %v995
        %v1052 = vadd.f32 %v940, %v1004
        %v1053 = vadd.f32 %v941, %v1013
        %v1054 = vadd.f32 %v942, %v1022
        %v1055 = vadd.f32 %v943, %v1031
        %v1056 = vadd.f32 %v944, %v1040
        %v1057 = vadd.f32 %v945, %v1049
        %v1058 = vsub.f32 %v1050, %v481
        %v1059 = vsub.f32 %v1051, %v486
        %v1060 = vsub.f32 %v1052, %v491
        %v1061 = vsub.f32 %v1053, %v496
        %v1062 = vsub.f32 %v1054, %v501
        %v1063 = vsub.f32 %v1055, %v506
        %v1064 = vsub.f32 %v1056, %v511
        %v1065 = vsub.f32 %v1057, %v516
        %v1066 = vmax.f32 %v1058, 1.192093e-07
        %v1067 = vmax.f32 %v1059, 1.192093e-07
        %v1068 = vmax.f32 %v1060, 1.192093e-07
        %v1069 = vmax.f32 %v1061, 1.192093e-07
        %v1070 = vmax.f32 %v1062, 1.192093e-07
        %v1071 = vmax.f32 %v1063, 1.192093e-07
        %v1072 = vmax.f32 %v1064, 1.192093e-07
        %v1073 = vmax.f32 %v1065, 1.192093e-07
        %v1074 = vmin.f32 %v1066, 15.942385
        %v1075 = vmin.f32 %v1067, 15.942385
        %v1076 = vmin.f32 %v1068, 15.942385
        %v1077 = vmin.f32 %v1069, 15.942385
        %v1078 = vmin.f32 %v1070, 15.942385
        %v1079 = vmin.f32 %v1071, 15.942385
        %v1080 = vmin.f32 %v1072, 15.942385
        %v1081 = vmin.f32 %v1073, 15.942385
        %v1082 = vmax.f32 %v1050, 1.192093e-07
        %v1083 = vmax.f32 %v1051, 1.192093e-07
        %v1084 = vmax.f32 %v1052, 1.192093e-07
        %v1085 = vmax.f32 %v1053, 1.192093e-07
        %v1086 = vmax.f32 %v1054, 1.192093e-07
        %v1087 = vmax.f32 %v1055, 1.192093e-07
        %v1088 = vmax.f32 %v1056, 1.192093e-07
        %v1089 = vmax.f32 %v1057, 1.192093e-07
        %v1090 = vmin.f32 %v1082, 15.942385
        %v1091 = vmin.f32 %v1083, 15.942385
        %v1092 = vmin.f32 %v1084, 15.942385
        %v1093 = vmin.f32 %v1085, 15.942385
        %v1094 = vmin.f32 %v1086, 15.942385
        %v1095 = vmin.f32 %v1087, 15.942385
        %v1096 = vmin.f32 %v1088, 15.942385
        %v1097 = vmin.f32 %v1089, 15.942385
        %v1098 = vmul.f32 %v930, %v1074
        %v1099 = vmul.f32 %v931, %v1075
        %v1100 = vmul.f32 %v932, %v1076
        %v1101 = vmul.f32 %v933, %v1077
        %v1102 = vmul.f32 %v934, %v1078
        %v1103 = vmul.f32 %v935, %v1079
        %v1104 = vmul.f32 %v936, %v1080
        %v1105 = vmul.f32 %v937, %v1081
        %v1106 = vsub.f32 1.0, %v930
        %v1107 = vsub.f32 1.0, %v931
        %v1108 = vsub.f32 1.0, %v932
        %v1109 = vsub.f32 1.0, %v933
        %v1110 = vsub.f32 1.0, %v934
        %v1111 = vsub.f32 1.0, %v935
        %v1112 = vsub.f32 1.0, %v936
        %v1113 = vsub.f32 1.0, %v937
        %v1114 = vmul.f32 %v1106, %v1090
        %v1115 = vmul.f32 %v1107, %v1091
        %v1116 = vmul.f32 %v1108, %v1092
        %v1117 = vmul.f32 %v1109, %v1093
        %v1118 = vmul.f32 %v1110, %v1094
        %v1119 = vmul.f32 %v1111, %v1095
        %v1120 = vmul.f32 %v1112, %v1096
        %v1121 = vmul.f32 %v1113, %v1097
        %v1122 = vadd.f32 %v1098, %v1114
        %v1123 = vadd.f32 %v1099, %v1115
        %v1124 = vadd.f32 %v1100, %v1116
        %v1125 = vadd.f32 %v1101, %v1117
        %v1126 = vadd.f32 %v1102, %v1118
        %v1127 = vadd.f32 %v1103, %v1119
        %v1128 = vadd.f32 %v1104, %v1120
        %v1129 = vadd.f32 %v1105, %v1121
        %v1130 = vlog2.pop %v930
        %v1131 = vmul.f32 %v1130, 0.6931472
        %v1132 = vlog2.pop %v931
        %v1133 = vmul.f32 %v1132, 0.6931472
        %v1134 = vlog2.pop %v932
        %v1135 = vmul.f32 %v1134, 0.6931472
        %v1136 = vlog2.pop %v933
        %v1137 = vmul.f32 %v1136, 0.6931472
        %v1138 = vlog2.pop %v934
        %v1139 = vmul.f32 %v1138, 0.6931472
        %v1140 = vlog2.pop %v935
        %v1141 = vmul.f32 %v1140, 0.6931472
        %v1142 = vlog2.pop %v936
        %v1143 = vmul.f32 %v1142, 0.6931472
        %v1144 = vlog2.pop %v937
        %v1145 = vmul.f32 %v1144, 0.6931472
        %v1146 = vmul.f32 %v930, %v1131
        %v1147 = vmul.f32 %v931, %v1133
        %v1148 = vmul.f32 %v932, %v1135
        %v1149 = vmul.f32 %v933, %v1137
        %v1150 = vmul.f32 %v934, %v1139
        %v1151 = vmul.f32 %v935, %v1141
        %v1152 = vmul.f32 %v936, %v1143
        %v1153 = vmul.f32 %v937, %v1145
        %v1154 = vlog2.pop %v1106
        %v1155 = vmul.f32 %v1154, 0.6931472
        %v1156 = vlog2.pop %v1107
        %v1157 = vmul.f32 %v1156, 0.6931472
        %v1158 = vlog2.pop %v1108
        %v1159 = vmul.f32 %v1158, 0.6931472
        %v1160 = vlog2.pop %v1109
        %v1161 = vmul.f32 %v1160, 0.6931472
        %v1162 = vlog2.pop %v1110
        %v1163 = vmul.f32 %v1162, 0.6931472
        %v1164 = vlog2.pop %v1111
        %v1165 = vmul.f32 %v1164, 0.6931472
        %v1166 = vlog2.pop %v1112
        %v1167 = vmul.f32 %v1166, 0.6931472
        %v1168 = vlog2.pop %v1113
        %v1169 = vmul.f32 %v1168, 0.6931472
        %v1170 = vmul.f32 %v1106, %v1155
        %v1171 = vmul.f32 %v1107, %v1157
        %v1172 = vmul.f32 %v1108, %v1159
        %v1173 = vmul.f32 %v1109, %v1161
        %v1174 = vmul.f32 %v1110, %v1163
        %v1175 = vmul.f32 %v1111, %v1165
        %v1176 = vmul.f32 %v1112, %v1167
        %v1177 = vmul.f32 %v1113, %v1169
        %v1178 = vadd.f32 %v1146, %v1170
        %v1179 = vadd.f32 %v1147, %v1171
        %v1180 = vadd.f32 %v1148, %v1172
        %v1181 = vadd.f32 %v1149, %v1173
        %v1182 = vadd.f32 %v1150, %v1174
        %v1183 = vadd.f32 %v1151, %v1175
        %v1184 = vadd.f32 %v1152, %v1176
        %v1185 = vadd.f32 %v1153, %v1177
        %v1186 = vsub.f32 0.0, %v1178
        %v1187 = vsub.f32 0.0, %v1179
        %v1188 = vsub.f32 0.0, %v1180
        %v1189 = vsub.f32 0.0, %v1181
        %v1190 = vsub.f32 0.0, %v1182
        %v1191 = vsub.f32 0.0, %v1183
        %v1192 = vsub.f32 0.0, %v1184
        %v1193 = vsub.f32 0.0, %v1185
        %s1194 = smul.u32 %s21, 64
        %v1195 = vlaneseq
        %v1196 = vshrl.u32 %v1195, 7
        %v1197 = vadd.s32 %v1196, 8
        %v1198 = vadd.s32 %v1196, 16
        %v1199 = vadd.s32 %v1196, 24
        %v1200 = vadd.s32 %v1196, 32
        %v1201 = vadd.s32 %v1196, 40
        %v1202 = vadd.s32 %v1196, 48
        %v1203 = vadd.s32 %v1196, 56
        %v1204 = vstv %s1194
        %v1205 = vadd.s32 %v1204, %v1196
        %v1206 = vadd.s32 %v1204, %v1197
        %v1207 = vadd.s32 %v1204, %v1198
        %v1208 = vadd.s32 %v1204, %v1199
        %v1209 = vadd.s32 %v1204, %v1200
        %v1210 = vadd.s32 %v1204, %v1201
        %v1211 = vadd.s32 %v1204, %v1202
        %v1212 = vadd.s32 %v1204, %v1203
        %vm1213 = vcmp.lt.s32.totalorder %v1205, 256
        %vm1214 = vcmp.lt.s32.totalorder %v1206, 256
        %vm1215 = vcmp.lt.s32.totalorder %v1207, 256
        %vm1216 = vcmp.lt.s32.totalorder %v1208, 256
        %vm1217 = vcmp.lt.s32.totalorder %v1209, 256
        %vm1218 = vcmp.lt.s32.totalorder %v1210, 256
        %vm1219 = vcmp.lt.s32.totalorder %v1211, 256
        %vm1220 = vcmp.lt.s32.totalorder %v1212, 256
        %v1221 = vsel %vm1213, 1, 0
        %v1222 = vsel %vm1214, 1, 0
        %v1223 = vsel %vm1215, 1, 0
        %v1224 = vsel %vm1216, 1, 0
        %v1225 = vsel %vm1217, 1, 0
        %v1226 = vsel %vm1218, 1, 0
        %v1227 = vsel %vm1219, 1, 0
        %v1228 = vsel %vm1220, 1, 0
        %v1229 = vcvt.s32.f32 %v1221
        %v1230 = vcvt.s32.f32 %v1222
        %v1231 = vcvt.s32.f32 %v1223
        %v1232 = vcvt.s32.f32 %v1224
        %v1233 = vcvt.s32.f32 %v1225
        %v1234 = vcvt.s32.f32 %v1226
        %v1235 = vcvt.s32.f32 %v1227
        %v1236 = vcvt.s32.f32 %v1228
        %v1237 = vsub.f32 %v1122, %v1186
        %v1238 = vsub.f32 %v1123, %v1187
        %v1239 = vsub.f32 %v1124, %v1188
        %v1240 = vsub.f32 %v1125, %v1189
        %v1241 = vsub.f32 %v1126, %v1190
        %v1242 = vsub.f32 %v1127, %v1191
        %v1243 = vsub.f32 %v1128, %v1192
        %v1244 = vsub.f32 %v1129, %v1193
        %v1245 = vmul.f32 %v1237, %v1229
        %v1246 = vmul.f32 %v1238, %v1230
        %v1247 = vmul.f32 %v1239, %v1231
        %v1248 = vmul.f32 %v1240, %v1232
        %v1249 = vmul.f32 %v1241, %v1233
        %v1250 = vmul.f32 %v1242, %v1234
        %v1251 = vmul.f32 %v1243, %v1235
        %v1252 = vmul.f32 %v1244, %v1236
        %vm1253 = vcmask 261120
        %v1254 = vsel %vm1253, %v1245, 0.0
        %1255 = vadd.xlane.f32.xlu0 %v1254
        %v1256 = vpop.xlane.xlu0 %1255
        %v1257 = vsel %vm1253, %v1246, 0.0
        %1258 = vadd.xlane.f32.xlu0 %v1257
        %v1259 = vpop.xlane.xlu0 %1258
        %v1260 = vsel %vm1253, %v1247, 0.0
        %1261 = vadd.xlane.f32.xlu0 %v1260
        %v1262 = vpop.xlane.xlu0 %1261
        %v1263 = vsel %vm1253, %v1248, 0.0
        %1264 = vadd.xlane.f32.xlu0 %v1263
        %v1265 = vpop.xlane.xlu0 %1264
        %v1266 = vsel %vm1253, %v1249, 0.0
        %1267 = vadd.xlane.f32.xlu0 %v1266
        %v1268 = vpop.xlane.xlu0 %1267
        %v1269 = vsel %vm1253, %v1250, 0.0
        %1270 = vadd.xlane.f32.xlu0 %v1269
        %v1271 = vpop.xlane.xlu0 %1270
        %v1272 = vsel %vm1253, %v1251, 0.0
        %1273 = vadd.xlane.f32.xlu0 %v1272
        %v1274 = vpop.xlane.xlu0 %1273
        %v1275 = vsel %vm1253, %v1252, 0.0
        %1276 = vadd.xlane.f32.xlu0 %v1275
        %v1277 = vpop.xlane.xlu0 %1276
        %v1278 = vadd.f32 %v1256, %v1259
        %v1279 = vadd.f32 %v1278, %v1262
        %v1280 = vadd.f32 %v1279, %v1265
        %v1281 = vadd.f32 %v1280, %v1268
        %v1282 = vadd.f32 %v1281, %v1271
        %v1283 = vadd.f32 %v1282, %v1274
        %v1284 = vadd.f32 %v1283, %v1277
        %v1285 = vrot.slane %v1284, 4
        %v1286 = vadd.f32 %v1284, %v1285
        %v1287 = vrot.slane %v1286, 2
        %v1288 = vadd.f32 %v1286, %v1287
        %v1289 = vrot.slane %v1288, 1
        %v1290 = vadd.f32 %v1288, %v1289
        %1291 = vst [vmem:[%s306] sm:$0xff] %v1290
        %s1292 = sand.u32 %s191, 1
        %s1293 = scalar_lea.sflag [#allocation3], %s1292
        %s1294 = sand.u32 %s191, 1
        %s1295 = smul.addr %s1294, 8
        %s1296 = scalar_lea.vmem [#allocation2], %s1295
        // Predicated region
        $region49: #{tpu_custom_call.1} parent=47 // pred_check
          %p1297 = pneg %p201
        $region50: #{tpu_custom_call.1} parent=47 // pred_check_branch
          %1299 = sbr.rel (%p1297) target = $region52
        $region51: #{tpu_custom_call.1} parent=47 // pred_region
          %s1301 = ssub.s32 128, 128
          %1302 = vsyncadd %s1293, %s1301
          %s1303 = smul.addr %s21, 128
          %s1304 = scalar_lea.hbm %s7, %s1303
          %s1306 = sshll.u32 %s1296, 4
          %s1307 = int_to_ptr.vmem [resolvable:$true] %s1306
          %1309 = dma.vmem_to_hbm [thread:$0]  %s1307, 128, %s1304, %s1293
        $region52: #{tpu_custom_call.1} parent=47 // pred_fallthru
          _
      $region48: #{tpu_custom_call.1} parent=5 // pred_fallthru
        _
      %p1310 = scmp.le.s32.totalorder 2, %s16
      // Predicated region
      $region53: #{tpu_custom_call.1} parent=5 // pred_check
        %p1311 = pneg %p1310
      $region54: #{tpu_custom_call.1} parent=5 // pred_check_branch
        %1313 = sbr.rel (%p1311) target = $region56
      $region55: #{tpu_custom_call.1} parent=5 // pred_region
        %s1314 = ssub.s32 %s16, 2
        // Predicated region
        $region57: #{tpu_custom_call.1} parent=55 // pred_check
          %p1315 = pneg %p207
        $region58: #{tpu_custom_call.1} parent=55 // pred_check_branch
          %1317 = sbr.rel (%p1315) target = $region60
        $region59: #{tpu_custom_call.1} parent=55 // pred_region
          %s1318 = sand.u32 %s192, 1
          %s1319 = scalar_lea.sflag [#allocation3], %s1318
          %s1320 = sand.u32 %s192, 1
          %s1321 = smul.addr %s1320, 8
          %s1322 = scalar_lea.vmem [#allocation2], %s1321
          %1323 = dma.done %s1319, 128
        $region60: #{tpu_custom_call.1} parent=55 // pred_fallthru
          _
      $region56: #{tpu_custom_call.1} parent=5 // pred_fallthru
        _
    $region6: #{tpu_custom_call.1} parent=1 // loop_footer
      %s20 = sadd.s32 1, %s16
    $region7: #{tpu_custom_call.1} parent=1 // loop_footer_branch
      %15 = sbr.rel target = $region3
    $region8: #{tpu_custom_call.1} parent=1 // loop_exit
      _
    %1324 = vsyncpa [#allocation3], 1
    %s1325 = scalar_lea.sflag [#allocation3], 1
    %1326 = vsyncpa %s1325, 1

</llo_original>
